<compile_context>
chip_gen: v5e
topology: v5e:2x2
jax: 0.10.0
libtpu: 0.0.40
codegen_flags: <defaults>
</compile_context>

<pallas_src>
import functools

import jax
import jax.numpy as jnp
from jax.experimental import pallas as pl
from jax.experimental.pallas import tpu as pltpu

D_IN = 196              # 14*14 (contraction dim of the first matmul)
H1, H1P = 200, 256      # hidden 1 (real, lane-padded)
H2, H2P = 84, 128       # hidden 2 (real, lane-padded)
D_OUT, D_OUTP = 10, 128 # output  (real, lane-padded)
BN_EPS = 1e-5
NEG_BIG = -1e30         # bias for padded logit columns -> exp() underflows to 0


# ---------------------------------------------------------------------------
# Fused 3-phase kernel (phase = slow grid axis, batch tile = fast grid axis)
# ---------------------------------------------------------------------------
def _make_kernel(batch, tile_m):
    inv_b = 1.0 / float(batch)

    def kernel(x_ref,
               w1_ref, b1_ref, g1_ref, be1_ref,
               w2_ref, b2_ref, g2_ref, be2_ref,
               w3_ref, b3_ref,
               o_ref,
               sum1, sumsq1, sum2, sumsq2,
               scale1, b2f, scale2, b3f):
        phase = pl.program_id(0)
        tile = pl.program_id(1)

        # rows of this tile that are real batch rows (last tile may be partial)
        row = tile * tile_m + jax.lax.broadcasted_iota(jnp.int32, (tile_m, 1), 0)
        valid = row < batch

        def layer1():
            # bf16 operands for the MXU, f32 accumulate / activations
            xb = x_ref[...].astype(jnp.bfloat16)
            h = jnp.dot(xb, w1_ref[...], preferred_element_type=jnp.float32)
            return jnp.maximum(h + b1_ref[...], 0.0)

        def layer2(h1):
            # BN1: scale as one row-broadcast multiply, shift folded into b2f
            h1s = (h1 * scale1[...]).astype(jnp.bfloat16)
            a = jnp.dot(h1s, w2_ref[...], preferred_element_type=jnp.float32)
            return jnp.maximum(a + b2f[...], 0.0)

        # ---------- phase 0: accumulate BN1 batch statistics ----------
        @pl.when(phase == 0)
        def _():
            @pl.when(tile == 0)
            def _():
                sum1[...] = jnp.zeros_like(sum1)
                sumsq1[...] = jnp.zeros_like(sumsq1)
                sum2[...] = jnp.zeros_like(sum2)
                sumsq2[...] = jnp.zeros_like(sumsq2)
            h1 = jnp.where(valid, layer1(), 0.0)
            sum1[...] += jnp.sum(h1, axis=0, keepdims=True)
            sumsq1[...] += jnp.sum(h1 * h1, axis=0, keepdims=True)

        # ---------- phase 1: finalize BN1, accumulate BN2 statistics ----------
        @pl.when(phase == 1)
        def _():
            @pl.when(tile == 0)
            def _():
                mean = sum1[...] * inv_b
                var = jnp.maximum(sumsq1[...] * inv_b - mean * mean, 0.0)
                sc = g1_ref[...] * jax.lax.rsqrt(var + BN_EPS)
                shift = be1_ref[...] - mean * sc
                scale1[...] = sc
                # B-independent bias fold: b2' = b2 + shift @ w2  (once per call)
                b2f[...] = b2_ref[...] + jnp.dot(
                    shift, w2_ref[...].astype(jnp.float32),
                    preferred_element_type=jnp.float32)
            h2 = jnp.where(valid, layer2(layer1()), 0.0)
            sum2[...] += jnp.sum(h2, axis=0, keepdims=True)
            sumsq2[...] += jnp.sum(h2 * h2, axis=0, keepdims=True)

        # ---------- phase 2: finalize BN2, layer 3 + softmax, write out ----------
        @pl.when(phase == 2)
        def _():
            @pl.when(tile == 0)
            def _():
                mean = sum2[...] * inv_b
                var = jnp.maximum(sumsq2[...] * inv_b - mean * mean, 0.0)
                sc = g2_ref[...] * jax.lax.rsqrt(var + BN_EPS)
                shift = be2_ref[...] - mean * sc
                scale2[...] = sc
                # padded b3 columns hold -1e30 and w3 padded rows are 0,
                # so padded logits stay at -1e30 -> exp underflows to 0.
                b3f[...] = b3_ref[...] + jnp.dot(
                    shift, w3_ref[...].astype(jnp.float32),
                    preferred_element_type=jnp.float32)
            h2 = layer2(layer1())
            h2s = (h2 * scale2[...]).astype(jnp.bfloat16)
            logits = jnp.dot(h2s, w3_ref[...],
                             preferred_element_type=jnp.float32) + b3f[...]
            m = jnp.max(logits, axis=-1, keepdims=True)
            e = jnp.exp(logits - m)
            denom = jnp.sum(e, axis=-1, keepdims=True)
            # exact division (one divide per row): rows sum to 1 in f32
            o_ref[...] = e / denom

    return kernel


# ---------------------------------------------------------------------------
# Parameter setup (raw PyTorch-equivalent params + one-time lane padding)
# ---------------------------------------------------------------------------
def init_params(key):
    """Unpadded f32 parameters, Linear weights stored as [in, out]."""
    ks = jax.random.split(key, 6)
    u = lambda k, shape, bound: jax.random.uniform(
        k, shape, jnp.float32, -bound, bound)
    s1 = 1.0 / (D_IN ** 0.5)
    s2 = 1.0 / (H1 ** 0.5)
    s3 = 1.0 / (H2 ** 0.5)
    return {
        "w1": u(ks[0], (D_IN, H1), s1), "b1": u(ks[1], (H1,), s1),
        "g1": jnp.ones((H1,), jnp.float32), "be1": jnp.zeros((H1,), jnp.float32),
        "w2": u(ks[2], (H1, H2), s2), "b2": u(ks[3], (H2,), s2),
        "g2": jnp.ones((H2,), jnp.float32), "be2": jnp.zeros((H2,), jnp.float32),
        "w3": u(ks[4], (H2, D_OUT), s3), "b3": u(ks[5], (D_OUT,), s3),
    }


def pad_params(p):
    """Zero-pad feature dims to lane-dense multiples of 128; weights -> bf16."""
    def pad2(a, rows, cols):
        return jnp.pad(a, ((0, rows - a.shape[0]), (0, cols - a.shape[1])))

    def padrow(a, cols, fill=0.0):
        out = jnp.full((1, cols), fill, jnp.float32)
        return out.at[0, :a.shape[0]].set(a)

    return {
        # bf16 weights: MXU-native on v5e/v6e/v7x, halves weight VMEM/HBM bytes
        "w1": pad2(p["w1"], D_IN, H1P).astype(jnp.bfloat16),
        "b1": padrow(p["b1"], H1P),
        "g1": padrow(p["g1"], H1P),
        "be1": padrow(p["be1"], H1P),
        "w2": pad2(p["w2"], H1P, H2P).astype(jnp.bfloat16),
        "b2": padrow(p["b2"], H2P),
        "g2": padrow(p["g2"], H2P),
        "be2": padrow(p["be2"], H2P),
        "w3": pad2(p["w3"], H2P, D_OUTP).astype(jnp.bfloat16),
        # padded logit columns get a huge negative bias -> softmax ignores them
        "b3": padrow(p["b3"], D_OUTP, fill=NEG_BIG),
    }


# ---------------------------------------------------------------------------
# Forward pass (single pallas_call) and a pure-JAX reference
# ---------------------------------------------------------------------------
def pre_a_loss2_forward_padded(padded_params, x, *, tm=512):
    """Returns the lane-dense (B, 128) softmax output (real probs in cols :10)."""
    feat = x.reshape(-1, D_IN).astype(jnp.float32)        # x.view(-1, 196)
    b = feat.shape[0]
    tile_m = min(tm, b)
    n_tiles = pl.cdiv(b, tile_m)
    pp = padded_params

    kernel = _make_kernel(b, tile_m)
    resident = lambda p, t: (0, 0)    # weights: same block every step -> VMEM-resident

    in_specs = [
        pl.BlockSpec((tile_m, D_IN), lambda p, t: (t, 0)),   # x tile
        pl.BlockSpec((D_IN, H1P), resident),                 # w1 (bf16)
        pl.BlockSpec((1, H1P), resident),                    # b1
        pl.BlockSpec((1, H1P), resident),                    # g1
        pl.BlockSpec((1, H1P), resident),                    # be1
        pl.BlockSpec((H1P, H2P), resident),                  # w2 (bf16)
        pl.BlockSpec((1, H2P), resident),                    # b2
        pl.BlockSpec((1, H2P), resident),                    # g2
        pl.BlockSpec((1, H2P), resident),                    # be2
        pl.BlockSpec((H2P, D_OUTP), resident),               # w3 (bf16)
        pl.BlockSpec((1, D_OUTP), resident),                 # b3
    ]
    out_specs = pl.BlockSpec((tile_m, D_OUTP), lambda p, t: (t, 0))
    scratch_shapes = [
        pltpu.VMEM((1, H1P), jnp.float32),    # sum1
        pltpu.VMEM((1, H1P), jnp.float32),    # sumsq1
        pltpu.VMEM((1, H2P), jnp.float32),    # sum2
        pltpu.VMEM((1, H2P), jnp.float32),    # sumsq2
        pltpu.VMEM((1, H1P), jnp.float32),    # scale1 = g1 * rsqrt(var1+eps)
        pltpu.VMEM((1, H2P), jnp.float32),    # b2'    = b2 + shift1 @ w2
        pltpu.VMEM((1, H2P), jnp.float32),    # scale2
        pltpu.VMEM((1, D_OUTP), jnp.float32), # b3'    = b3 + shift2 @ w3
    ]

    # VMEM limit sized from the actual buffers (not the scoped default)
    weight_bytes = 2 * (D_IN * H1P + H1P * H2P + H2P * D_OUTP)
    block_bytes = 2 * 4 * tile_m * (D_IN + D_OUTP)     # double-buffered x / out tiles
    act_bytes = 6 * 4 * tile_m * H1P                   # live intermediates (slack)
    vmem_bytes = int(min(max(2 * (weight_bytes + block_bytes + act_bytes) + (2 << 20),
                             4 << 20), 100 << 20))

    cost = pl.CostEstimate(
        flops=2 * b * (3 * D_IN * H1P + 2 * H1P * H2P + H2P * D_OUTP),
        transcendentals=b * D_OUTP + 2 * (H1P + H2P),
        bytes_accessed=3 * b * D_IN * 4 + b * D_OUTP * 4 + weight_bytes,
    )

    return pl.pallas_call(
        kernel,
        out_shape=jax.ShapeDtypeStruct((b, D_OUTP), jnp.float32),
        grid_spec=pltpu.PrefetchScalarGridSpec(
            num_scalar_prefetch=0,
            grid=(3, n_tiles),                 # (phase, batch tile); phase is slow axis
            in_specs=in_specs,
            out_specs=out_specs,
            scratch_shapes=scratch_shapes),
        compiler_params=pltpu.CompilerParams(
            dimension_semantics=("arbitrary", "arbitrary"),
            vmem_limit_bytes=vmem_bytes),
        cost_estimate=cost,
    )(feat,
      pp["w1"], pp["b1"], pp["g1"], pp["be1"],
      pp["w2"], pp["b2"], pp["g2"], pp["be2"],
      pp["w3"], pp["b3"])


def pre_a_loss2_forward(padded_params, x, *, tm=512):
    """(B, 10) softmax matching the PyTorch module.  Prefer the padded variant
    and fuse the [:, :10] slice into the downstream consumer when possible."""
    return pre_a_loss2_forward_padded(padded_params, x, tm=tm)[:, :D_OUT]


def reference_forward(p, x):
    """Pure f32 JAX reference with PyTorch training-mode BN semantics."""
    feat = x.reshape(-1, D_IN).astype(jnp.float32)

    def bn(h, g, b):
        mean = jnp.mean(h, axis=0, keepdims=True)
        var = jnp.mean(jnp.square(h - mean), axis=0, keepdims=True)
        return (h - mean) / jnp.sqrt(var + BN_EPS) * g + b

    h = jnp.maximum(feat @ p["w1"] + p["b1"], 0.0)
    h = bn(h, p["g1"], p["be1"])
    h = jnp.maximum(h @ p["w2"] + p["b2"], 0.0)
    h = bn(h, p["g2"], p["be2"])
    logits = h @ p["w3"] + p["b3"]
    return jax.nn.softmax(logits, axis=-1)


if __name__ == "__main__":
    key = jax.random.PRNGKey(0)
    k_param, k_input = jax.random.split(key)

    raw = init_params(k_param)
    padded = pad_params(raw)

    # PyTorch-style input; forward does x.view(-1, 196)  (14*14 = 196)
    x = jax.random.normal(k_input, (16, 1, 14, 14), jnp.float32)

    # small tile (tm=8 -> 2 batch tiles) so the cross-tile BN-stats
    # accumulation and all three phases are exercised
    fwd = jax.jit(functools.partial(pre_a_loss2_forward_padded, tm=8))
    y_pad = jax.block_until_ready(fwd(padded, x))

    y = y_pad[:, :D_OUT]      # slice deferred to the consumer (here: the test)
    assert y.shape == (16, D_OUT)
    assert bool(jnp.all(jnp.isfinite(y)))
    # exact-division softmax: rows sum to 1 within f32 rounding
    assert bool(jnp.all(jnp.abs(jnp.sum(y, axis=-1) - 1.0) < 1e-4))
    # compare against the pure-f32 reference (kernel uses bf16 MXU operands)
    y_ref = reference_forward(raw, x)
    assert bool(jnp.max(jnp.abs(y - y_ref)) < 2e-2)

    print("KERNEL_OK")
</pallas_src>

<mosaic_0001>
module attributes {stable_mosaic.version = 11 : i64} {
  func.func @kernel(%arg0: i32, %arg1: i32, %arg2: memref<8x196xf32, #tpu.memory_space<vmem>>, %arg3: memref<196x256xbf16, #tpu.memory_space<vmem>>, %arg4: memref<1x256xf32, #tpu.memory_space<vmem>>, %arg5: memref<1x256xf32, #tpu.memory_space<vmem>>, %arg6: memref<1x256xf32, #tpu.memory_space<vmem>>, %arg7: memref<256x128xbf16, #tpu.memory_space<vmem>>, %arg8: memref<1x128xf32, #tpu.memory_space<vmem>>, %arg9: memref<1x128xf32, #tpu.memory_space<vmem>>, %arg10: memref<1x128xf32, #tpu.memory_space<vmem>>, %arg11: memref<128x128xbf16, #tpu.memory_space<vmem>>, %arg12: memref<1x128xf32, #tpu.memory_space<vmem>>, %arg13: memref<8x128xf32, #tpu.memory_space<vmem>>, %arg14: memref<1x256xf32, #tpu.memory_space<vmem>>, %arg15: memref<1x256xf32, #tpu.memory_space<vmem>>, %arg16: memref<1x128xf32, #tpu.memory_space<vmem>>, %arg17: memref<1x128xf32, #tpu.memory_space<vmem>>, %arg18: memref<1x256xf32, #tpu.memory_space<vmem>>, %arg19: memref<1x128xf32, #tpu.memory_space<vmem>>, %arg20: memref<1x128xf32, #tpu.memory_space<vmem>>, %arg21: memref<1x128xf32, #tpu.memory_space<vmem>>) attributes {dimension_semantics = [#tpu.dimension_semantics<arbitrary>, #tpu.dimension_semantics<arbitrary>], iteration_bounds = array<i64: 3, 2>, scalar_prefetch = 0 : i64, scratch_operands = 8 : i64, tpu.core_type = #tpu.core_type<tc>, window_params = [{transform_indices = @transform_0, window_bounds = array<i64: 8, 196>}, {pipeline_mode = #tpu.pipeline_mode<synchronous>, transform_indices = @transform_1, window_bounds = array<i64: 196, 256>}, {pipeline_mode = #tpu.pipeline_mode<synchronous>, transform_indices = @transform_2, window_bounds = array<i64: 1, 256>}, {pipeline_mode = #tpu.pipeline_mode<synchronous>, transform_indices = @transform_3, window_bounds = array<i64: 1, 256>}, {pipeline_mode = #tpu.pipeline_mode<synchronous>, transform_indices = @transform_4, window_bounds = array<i64: 1, 256>}, {pipeline_mode = #tpu.pipeline_mode<synchronous>, transform_indices = @transform_5, window_bounds = array<i64: 256, 128>}, {pipeline_mode = #tpu.pipeline_mode<synchronous>, transform_indices = @transform_6, window_bounds = array<i64: 1, 128>}, {pipeline_mode = #tpu.pipeline_mode<synchronous>, transform_indices = @transform_7, window_bounds = array<i64: 1, 128>}, {pipeline_mode = #tpu.pipeline_mode<synchronous>, transform_indices = @transform_8, window_bounds = array<i64: 1, 128>}, {pipeline_mode = #tpu.pipeline_mode<synchronous>, transform_indices = @transform_9, window_bounds = array<i64: 128, 128>}, {pipeline_mode = #tpu.pipeline_mode<synchronous>, transform_indices = @transform_10, window_bounds = array<i64: 1, 128>}, {transform_indices = @transform_11, window_bounds = array<i64: 8, 128>}]} {
    %c8_i32 = arith.constant 8 : i32
    %0 = arith.muli %arg1, %c8_i32 : i32
    %1 = tpu.iota {dimensions = array<i32: 0>} : vector<8x1xi32>
    %2 = vector.broadcast %0 : i32 to vector<8x1xi32>
    %3 = arith.addi %2, %1 : vector<8x1xi32>
    %c16_i32 = arith.constant 16 : i32
    %4 = vector.broadcast %c16_i32 : i32 to vector<8x1xi32>
    %5 = arith.cmpi slt, %3, %4 : vector<8x1xi32>
    %c0_i32 = arith.constant 0 : i32
    %6 = arith.cmpi eq, %arg0, %c0_i32 : i32
    %7 = arith.extui %6 : i1 to i32
    %c0_i32_0 = arith.constant 0 : i32
    %8 = arith.cmpi ne, %7, %c0_i32_0 : i32
    scf.if %8 {
      %c0_i32_3 = arith.constant 0 : i32
      %15 = arith.cmpi eq, %arg1, %c0_i32_3 : i32
      %16 = arith.extui %15 : i1 to i32
      %c0_i32_4 = arith.constant 0 : i32
      %17 = arith.cmpi ne, %16, %c0_i32_4 : i32
      scf.if %17 {
        %cst_22 = arith.constant 0.000000e+00 : f32
        %42 = vector.broadcast %cst_22 : f32 to vector<1x256xf32>
        %c0_23 = arith.constant 0 : index
        %c0_24 = arith.constant 0 : index
        %43 = vector.load %arg14[%c0_23, %c0_24] : memref<1x256xf32, #tpu.memory_space<vmem>>, vector<1x256xf32>
        tpu.vector_store %arg14[%c0_23, %c0_24], %42 {strides = array<i32>} : memref<1x256xf32, #tpu.memory_space<vmem>>, vector<1x256xf32>,
        %cst_25 = arith.constant 0.000000e+00 : f32
        %44 = vector.broadcast %cst_25 : f32 to vector<1x256xf32>
        %c0_26 = arith.constant 0 : index
        %c0_27 = arith.constant 0 : index
        %45 = vector.load %arg15[%c0_26, %c0_27] : memref<1x256xf32, #tpu.memory_space<vmem>>, vector<1x256xf32>
        tpu.vector_store %arg15[%c0_26, %c0_27], %44 {strides = array<i32>} : memref<1x256xf32, #tpu.memory_space<vmem>>, vector<1x256xf32>,
        %cst_28 = arith.constant 0.000000e+00 : f32
        %46 = vector.broadcast %cst_28 : f32 to vector<1x128xf32>
        %c0_29 = arith.constant 0 : index
        %c0_30 = arith.constant 0 : index
        %47 = vector.load %arg16[%c0_29, %c0_30] : memref<1x128xf32, #tpu.memory_space<vmem>>, vector<1x128xf32>
        tpu.vector_store %arg16[%c0_29, %c0_30], %46 {strides = array<i32>} : memref<1x128xf32, #tpu.memory_space<vmem>>, vector<1x128xf32>,
        %cst_31 = arith.constant 0.000000e+00 : f32
        %48 = vector.broadcast %cst_31 : f32 to vector<1x128xf32>
        %c0_32 = arith.constant 0 : index
        %c0_33 = arith.constant 0 : index
        %49 = vector.load %arg17[%c0_32, %c0_33] : memref<1x128xf32, #tpu.memory_space<vmem>>, vector<1x128xf32>
        tpu.vector_store %arg17[%c0_32, %c0_33], %48 {strides = array<i32>} : memref<1x128xf32, #tpu.memory_space<vmem>>, vector<1x128xf32>,
      } else {
      }
      %c0 = arith.constant 0 : index
      %c0_5 = arith.constant 0 : index
      %18 = vector.load %arg2[%c0, %c0_5] : memref<8x196xf32, #tpu.memory_space<vmem>>, vector<8x196xf32>
      %19 = arith.truncf %18 : vector<8x196xf32> to vector<8x196xbf16>
      %c0_6 = arith.constant 0 : index
      %c0_7 = arith.constant 0 : index
      %20 = vector.load %arg3[%c0_6, %c0_7] : memref<196x256xbf16, #tpu.memory_space<vmem>>, vector<196x256xbf16>
      %cst = arith.constant dense<0.000000e+00> : vector<8x256xf32>
      %21 = tpu.matmul %19, %20, %cst {dimension_numbers = #tpu.dot_dimension_numbers<[1], [0], [0], [1], [0, 0, 1, 1], [], []>} : vector<8x196xbf16>, vector<196x256xbf16>, vector<8x256xf32> -> vector<8x256xf32>
      %c0_8 = arith.constant 0 : index
      %c0_9 = arith.constant 0 : index
      %22 = vector.load %arg4[%c0_8, %c0_9] : memref<1x256xf32, #tpu.memory_space<vmem>>, vector<1x256xf32>
      %23 = vector.broadcast %22 : vector<1x256xf32> to vector<8x256xf32>
      %24 = arith.addf %21, %23 : vector<8x256xf32>
      %cst_10 = arith.constant 0.000000e+00 : f32
      %25 = vector.broadcast %cst_10 : f32 to vector<8x256xf32>
      %26 = arith.maximumf %24, %25 : vector<8x256xf32>
      %cst_11 = arith.constant 0.000000e+00 : f32
      %27 = vector.shape_cast %5 : vector<8x1xi1> to vector<8x1xi1>
      %28 = vector.broadcast %27 : vector<8x1xi1> to vector<8x256xi1>
      %29 = vector.broadcast %cst_11 : f32 to vector<8x256xf32>
      %30 = arith.select %28, %26, %29 : vector<8x256xi1>, vector<8x256xf32>
      %c0_12 = arith.constant 0 : index
      %c0_13 = arith.constant 0 : index
      %31 = vector.load %arg14[%c0_12, %c0_13] : memref<1x256xf32, #tpu.memory_space<vmem>>, vector<1x256xf32>
      %cst_14 = arith.constant dense<0.000000e+00> : vector<256xf32>
      %32 = vector.multi_reduction <add>, %30, %cst_14 [0] : vector<8x256xf32> to vector<256xf32>
      %33 = vector.shape_cast %32 : vector<256xf32> to vector<1x256xf32>
      %34 = arith.addf %31, %33 : vector<1x256xf32>
      %c0_15 = arith.constant 0 : index
      %c0_16 = arith.constant 0 : index
      %35 = vector.load %arg14[%c0_15, %c0_16] : memref<1x256xf32, #tpu.memory_space<vmem>>, vector<1x256xf32>
      tpu.vector_store %arg14[%c0_15, %c0_16], %34 {strides = array<i32>} : memref<1x256xf32, #tpu.memory_space<vmem>>, vector<1x256xf32>,
      %c0_17 = arith.constant 0 : index
      %c0_18 = arith.constant 0 : index
      %36 = vector.load %arg15[%c0_17, %c0_18] : memref<1x256xf32, #tpu.memory_space<vmem>>, vector<1x256xf32>
      %37 = arith.mulf %30, %30 : vector<8x256xf32>
      %cst_19 = arith.constant dense<0.000000e+00> : vector<256xf32>
      %38 = vector.multi_reduction <add>, %37, %cst_19 [0] : vector<8x256xf32> to vector<256xf32>
      %39 = vector.shape_cast %38 : vector<256xf32> to vector<1x256xf32>
      %40 = arith.addf %36, %39 : vector<1x256xf32>
      %c0_20 = arith.constant 0 : index
      %c0_21 = arith.constant 0 : index
      %41 = vector.load %arg15[%c0_20, %c0_21] : memref<1x256xf32, #tpu.memory_space<vmem>>, vector<1x256xf32>
      tpu.vector_store %arg15[%c0_20, %c0_21], %40 {strides = array<i32>} : memref<1x256xf32, #tpu.memory_space<vmem>>, vector<1x256xf32>,
    } else {
    }
    %c1_i32 = arith.constant 1 : i32
    %9 = arith.cmpi eq, %arg0, %c1_i32 : i32
    %10 = arith.extui %9 : i1 to i32
    %c0_i32_1 = arith.constant 0 : i32
    %11 = arith.cmpi ne, %10, %c0_i32_1 : i32
    scf.if %11 {
      %c0_i32_3 = arith.constant 0 : i32
      %15 = arith.cmpi eq, %arg1, %c0_i32_3 : i32
      %16 = arith.extui %15 : i1 to i32
      %c0_i32_4 = arith.constant 0 : i32
      %17 = arith.cmpi ne, %16, %c0_i32_4 : i32
      scf.if %17 {
        %c0_30 = arith.constant 0 : index
        %c0_31 = arith.constant 0 : index
        %53 = vector.load %arg14[%c0_30, %c0_31] : memref<1x256xf32, #tpu.memory_space<vmem>>, vector<1x256xf32>
        %cst_32 = arith.constant 6.250000e-02 : f32
        %54 = vector.broadcast %cst_32 : f32 to vector<1x256xf32>
        %55 = arith.mulf %53, %54 : vector<1x256xf32>
        %c0_33 = arith.constant 0 : index
        %c0_34 = arith.constant 0 : index
        %56 = vector.load %arg15[%c0_33, %c0_34] : memref<1x256xf32, #tpu.memory_space<vmem>>, vector<1x256xf32>
        %cst_35 = arith.constant 6.250000e-02 : f32
        %57 = vector.broadcast %cst_35 : f32 to vector<1x256xf32>
        %58 = arith.mulf %56, %57 : vector<1x256xf32>
        %59 = arith.mulf %55, %55 : vector<1x256xf32>
        %60 = arith.subf %58, %59 : vector<1x256xf32>
        %cst_36 = arith.constant 0.000000e+00 : f32
        %61 = vector.broadcast %cst_36 : f32 to vector<1x256xf32>
        %62 = arith.maximumf %60, %61 : vector<1x256xf32>
        %c0_37 = arith.constant 0 : index
        %c0_38 = arith.constant 0 : index
        %63 = vector.load %arg5[%c0_37, %c0_38] : memref<1x256xf32, #tpu.memory_space<vmem>>, vector<1x256xf32>
        %cst_39 = arith.constant 9.99999974E-6 : f32
        %64 = vector.broadcast %cst_39 : f32 to vector<1x256xf32>
        %65 = arith.addf %62, %64 : vector<1x256xf32>
        %66 = math.rsqrt %65 : vector<1x256xf32>
        %67 = arith.mulf %63, %66 : vector<1x256xf32>
        %c0_40 = arith.constant 0 : index
        %c0_41 = arith.constant 0 : index
        %68 = vector.load %arg6[%c0_40, %c0_41] : memref<1x256xf32, #tpu.memory_space<vmem>>, vector<1x256xf32>
        %69 = arith.mulf %55, %67 : vector<1x256xf32>
        %70 = arith.subf %68, %69 : vector<1x256xf32>
        %c0_42 = arith.constant 0 : index
        %c0_43 = arith.constant 0 : index
        %71 = vector.load %arg18[%c0_42, %c0_43] : memref<1x256xf32, #tpu.memory_space<vmem>>, vector<1x256xf32>
        tpu.vector_store %arg18[%c0_42, %c0_43], %67 {strides = array<i32>} : memref<1x256xf32, #tpu.memory_space<vmem>>, vector<1x256xf32>,
        %c0_44 = arith.constant 0 : index
        %c0_45 = arith.constant 0 : index
        %72 = vector.load %arg8[%c0_44, %c0_45] : memref<1x128xf32, #tpu.memory_space<vmem>>, vector<1x128xf32>
        %c0_46 = arith.constant 0 : index
        %c0_47 = arith.constant 0 : index
        %73 = vector.load %arg7[%c0_46, %c0_47] : memref<256x128xbf16, #tpu.memory_space<vmem>>, vector<256x128xbf16>
        %74 = arith.extf %73 : vector<256x128xbf16> to vector<256x128xf32>
        %cst_48 = arith.constant dense<0.000000e+00> : vector<1x128xf32>
        %75 = tpu.matmul %70, %74, %cst_48 {dimension_numbers = #tpu.dot_dimension_numbers<[1], [0], [0], [1], [0, 0, 1, 1], [], []>} : vector<1x256xf32>, vector<256x128xf32>, vector<1x128xf32> -> vector<1x128xf32>
        %76 = arith.addf %72, %75 : vector<1x128xf32>
        %c0_49 = arith.constant 0 : index
        %c0_50 = arith.constant 0 : index
        %77 = vector.load %arg19[%c0_49, %c0_50] : memref<1x128xf32, #tpu.memory_space<vmem>>, vector<1x128xf32>
        tpu.vector_store %arg19[%c0_49, %c0_50], %76 {strides = array<i32>} : memref<1x128xf32, #tpu.memory_space<vmem>>, vector<1x128xf32>,
      } else {
      }
      %c0 = arith.constant 0 : index
      %c0_5 = arith.constant 0 : index
      %18 = vector.load %arg2[%c0, %c0_5] : memref<8x196xf32, #tpu.memory_space<vmem>>, vector<8x196xf32>
      %19 = arith.truncf %18 : vector<8x196xf32> to vector<8x196xbf16>
      %c0_6 = arith.constant 0 : index
      %c0_7 = arith.constant 0 : index
      %20 = vector.load %arg3[%c0_6, %c0_7] : memref<196x256xbf16, #tpu.memory_space<vmem>>, vector<196x256xbf16>
      %cst = arith.constant dense<0.000000e+00> : vector<8x256xf32>
      %21 = tpu.matmul %19, %20, %cst {dimension_numbers = #tpu.dot_dimension_numbers<[1], [0], [0], [1], [0, 0, 1, 1], [], []>} : vector<8x196xbf16>, vector<196x256xbf16>, vector<8x256xf32> -> vector<8x256xf32>
      %c0_8 = arith.constant 0 : index
      %c0_9 = arith.constant 0 : index
      %22 = vector.load %arg4[%c0_8, %c0_9] : memref<1x256xf32, #tpu.memory_space<vmem>>, vector<1x256xf32>
      %23 = vector.broadcast %22 : vector<1x256xf32> to vector<8x256xf32>
      %24 = arith.addf %21, %23 : vector<8x256xf32>
      %cst_10 = arith.constant 0.000000e+00 : f32
      %25 = vector.broadcast %cst_10 : f32 to vector<8x256xf32>
      %26 = arith.maximumf %24, %25 : vector<8x256xf32>
      %c0_11 = arith.constant 0 : index
      %c0_12 = arith.constant 0 : index
      %27 = vector.load %arg18[%c0_11, %c0_12] : memref<1x256xf32, #tpu.memory_space<vmem>>, vector<1x256xf32>
      %28 = vector.broadcast %27 : vector<1x256xf32> to vector<8x256xf32>
      %29 = arith.mulf %26, %28 : vector<8x256xf32>
      %30 = arith.truncf %29 : vector<8x256xf32> to vector<8x256xbf16>
      %c0_13 = arith.constant 0 : index
      %c0_14 = arith.constant 0 : index
      %31 = vector.load %arg7[%c0_13, %c0_14] : memref<256x128xbf16, #tpu.memory_space<vmem>>, vector<256x128xbf16>
      %cst_15 = arith.constant dense<0.000000e+00> : vector<8x128xf32>
      %32 = tpu.matmul %30, %31, %cst_15 {dimension_numbers = #tpu.dot_dimension_numbers<[1], [0], [0], [1], [0, 0, 1, 1], [], []>} : vector<8x256xbf16>, vector<256x128xbf16>, vector<8x128xf32> -> vector<8x128xf32>
      %c0_16 = arith.constant 0 : index
      %c0_17 = arith.constant 0 : index
      %33 = vector.load %arg19[%c0_16, %c0_17] : memref<1x128xf32, #tpu.memory_space<vmem>>, vector<1x128xf32>
      %34 = vector.broadcast %33 : vector<1x128xf32> to vector<8x128xf32>
      %35 = arith.addf %32, %34 : vector<8x128xf32>
      %cst_18 = arith.constant 0.000000e+00 : f32
      %36 = vector.broadcast %cst_18 : f32 to vector<8x128xf32>
      %37 = arith.maximumf %35, %36 : vector<8x128xf32>
      %cst_19 = arith.constant 0.000000e+00 : f32
      %38 = vector.shape_cast %5 : vector<8x1xi1> to vector<8x1xi1>
      %39 = vector.broadcast %38 : vector<8x1xi1> to vector<8x128xi1>
      %40 = vector.broadcast %cst_19 : f32 to vector<8x128xf32>
      %41 = arith.select %39, %37, %40 : vector<8x128xi1>, vector<8x128xf32>
      %c0_20 = arith.constant 0 : index
      %c0_21 = arith.constant 0 : index
      %42 = vector.load %arg16[%c0_20, %c0_21] : memref<1x128xf32, #tpu.memory_space<vmem>>, vector<1x128xf32>
      %cst_22 = arith.constant dense<0.000000e+00> : vector<128xf32>
      %43 = vector.multi_reduction <add>, %41, %cst_22 [0] : vector<8x128xf32> to vector<128xf32>
      %44 = vector.shape_cast %43 : vector<128xf32> to vector<1x128xf32>
      %45 = arith.addf %42, %44 : vector<1x128xf32>
      %c0_23 = arith.constant 0 : index
      %c0_24 = arith.constant 0 : index
      %46 = vector.load %arg16[%c0_23, %c0_24] : memref<1x128xf32, #tpu.memory_space<vmem>>, vector<1x128xf32>
      tpu.vector_store %arg16[%c0_23, %c0_24], %45 {strides = array<i32>} : memref<1x128xf32, #tpu.memory_space<vmem>>, vector<1x128xf32>,
      %c0_25 = arith.constant 0 : index
      %c0_26 = arith.constant 0 : index
      %47 = vector.load %arg17[%c0_25, %c0_26] : memref<1x128xf32, #tpu.memory_space<vmem>>, vector<1x128xf32>
      %48 = arith.mulf %41, %41 : vector<8x128xf32>
      %cst_27 = arith.constant dense<0.000000e+00> : vector<128xf32>
      %49 = vector.multi_reduction <add>, %48, %cst_27 [0] : vector<8x128xf32> to vector<128xf32>
      %50 = vector.shape_cast %49 : vector<128xf32> to vector<1x128xf32>
      %51 = arith.addf %47, %50 : vector<1x128xf32>
      %c0_28 = arith.constant 0 : index
      %c0_29 = arith.constant 0 : index
      %52 = vector.load %arg17[%c0_28, %c0_29] : memref<1x128xf32, #tpu.memory_space<vmem>>, vector<1x128xf32>
      tpu.vector_store %arg17[%c0_28, %c0_29], %51 {strides = array<i32>} : memref<1x128xf32, #tpu.memory_space<vmem>>, vector<1x128xf32>,
    } else {
    }
    %c2_i32 = arith.constant 2 : i32
    %12 = arith.cmpi eq, %arg0, %c2_i32 : i32
    %13 = arith.extui %12 : i1 to i32
    %c0_i32_2 = arith.constant 0 : i32
    %14 = arith.cmpi ne, %13, %c0_i32_2 : i32
    scf.if %14 {
      %c0_i32_3 = arith.constant 0 : i32
      %15 = arith.cmpi eq, %arg1, %c0_i32_3 : i32
      %16 = arith.extui %15 : i1 to i32
      %c0_i32_4 = arith.constant 0 : i32
      %17 = arith.cmpi ne, %16, %c0_i32_4 : i32
      scf.if %17 {
        %c0_30 = arith.constant 0 : index
        %c0_31 = arith.constant 0 : index
        %57 = vector.load %arg16[%c0_30, %c0_31] : memref<1x128xf32, #tpu.memory_space<vmem>>, vector<1x128xf32>
        %cst_32 = arith.constant 6.250000e-02 : f32
        %58 = vector.broadcast %cst_32 : f32 to vector<1x128xf32>
        %59 = arith.mulf %57, %58 : vector<1x128xf32>
        %c0_33 = arith.constant 0 : index
        %c0_34 = arith.constant 0 : index
        %60 = vector.load %arg17[%c0_33, %c0_34] : memref<1x128xf32, #tpu.memory_space<vmem>>, vector<1x128xf32>
        %cst_35 = arith.constant 6.250000e-02 : f32
        %61 = vector.broadcast %cst_35 : f32 to vector<1x128xf32>
        %62 = arith.mulf %60, %61 : vector<1x128xf32>
        %63 = arith.mulf %59, %59 : vector<1x128xf32>
        %64 = arith.subf %62, %63 : vector<1x128xf32>
        %cst_36 = arith.constant 0.000000e+00 : f32
        %65 = vector.broadcast %cst_36 : f32 to vector<1x128xf32>
        %66 = arith.maximumf %64, %65 : vector<1x128xf32>
        %c0_37 = arith.constant 0 : index
        %c0_38 = arith.constant 0 : index
        %67 = vector.load %arg9[%c0_37, %c0_38] : memref<1x128xf32, #tpu.memory_space<vmem>>, vector<1x128xf32>
        %cst_39 = arith.constant 9.99999974E-6 : f32
        %68 = vector.broadcast %cst_39 : f32 to vector<1x128xf32>
        %69 = arith.addf %66, %68 : vector<1x128xf32>
        %70 = math.rsqrt %69 : vector<1x128xf32>
        %71 = arith.mulf %67, %70 : vector<1x128xf32>
        %c0_40 = arith.constant 0 : index
        %c0_41 = arith.constant 0 : index
        %72 = vector.load %arg10[%c0_40, %c0_41] : memref<1x128xf32, #tpu.memory_space<vmem>>, vector<1x128xf32>
        %73 = arith.mulf %59, %71 : vector<1x128xf32>
        %74 = arith.subf %72, %73 : vector<1x128xf32>
        %c0_42 = arith.constant 0 : index
        %c0_43 = arith.constant 0 : index
        %75 = vector.load %arg20[%c0_42, %c0_43] : memref<1x128xf32, #tpu.memory_space<vmem>>, vector<1x128xf32>
        tpu.vector_store %arg20[%c0_42, %c0_43], %71 {strides = array<i32>} : memref<1x128xf32, #tpu.memory_space<vmem>>, vector<1x128xf32>,
        %c0_44 = arith.constant 0 : index
        %c0_45 = arith.constant 0 : index
        %76 = vector.load %arg12[%c0_44, %c0_45] : memref<1x128xf32, #tpu.memory_space<vmem>>, vector<1x128xf32>
        %c0_46 = arith.constant 0 : index
        %c0_47 = arith.constant 0 : index
        %77 = vector.load %arg11[%c0_46, %c0_47] : memref<128x128xbf16, #tpu.memory_space<vmem>>, vector<128x128xbf16>
        %78 = arith.extf %77 : vector<128x128xbf16> to vector<128x128xf32>
        %cst_48 = arith.constant dense<0.000000e+00> : vector<1x128xf32>
        %79 = tpu.matmul %74, %78, %cst_48 {dimension_numbers = #tpu.dot_dimension_numbers<[1], [0], [0], [1], [0, 0, 1, 1], [], []>} : vector<1x128xf32>, vector<128x128xf32>, vector<1x128xf32> -> vector<1x128xf32>
        %80 = arith.addf %76, %79 : vector<1x128xf32>
        %c0_49 = arith.constant 0 : index
        %c0_50 = arith.constant 0 : index
        %81 = vector.load %arg21[%c0_49, %c0_50] : memref<1x128xf32, #tpu.memory_space<vmem>>, vector<1x128xf32>
        tpu.vector_store %arg21[%c0_49, %c0_50], %80 {strides = array<i32>} : memref<1x128xf32, #tpu.memory_space<vmem>>, vector<1x128xf32>,
      } else {
      }
      %c0 = arith.constant 0 : index
      %c0_5 = arith.constant 0 : index
      %18 = vector.load %arg2[%c0, %c0_5] : memref<8x196xf32, #tpu.memory_space<vmem>>, vector<8x196xf32>
      %19 = arith.truncf %18 : vector<8x196xf32> to vector<8x196xbf16>
      %c0_6 = arith.constant 0 : index
      %c0_7 = arith.constant 0 : index
      %20 = vector.load %arg3[%c0_6, %c0_7] : memref<196x256xbf16, #tpu.memory_space<vmem>>, vector<196x256xbf16>
      %cst = arith.constant dense<0.000000e+00> : vector<8x256xf32>
      %21 = tpu.matmul %19, %20, %cst {dimension_numbers = #tpu.dot_dimension_numbers<[1], [0], [0], [1], [0, 0, 1, 1], [], []>} : vector<8x196xbf16>, vector<196x256xbf16>, vector<8x256xf32> -> vector<8x256xf32>
      %c0_8 = arith.constant 0 : index
      %c0_9 = arith.constant 0 : index
      %22 = vector.load %arg4[%c0_8, %c0_9] : memref<1x256xf32, #tpu.memory_space<vmem>>, vector<1x256xf32>
      %23 = vector.broadcast %22 : vector<1x256xf32> to vector<8x256xf32>
      %24 = arith.addf %21, %23 : vector<8x256xf32>
      %cst_10 = arith.constant 0.000000e+00 : f32
      %25 = vector.broadcast %cst_10 : f32 to vector<8x256xf32>
      %26 = arith.maximumf %24, %25 : vector<8x256xf32>
      %c0_11 = arith.constant 0 : index
      %c0_12 = arith.constant 0 : index
      %27 = vector.load %arg18[%c0_11, %c0_12] : memref<1x256xf32, #tpu.memory_space<vmem>>, vector<1x256xf32>
      %28 = vector.broadcast %27 : vector<1x256xf32> to vector<8x256xf32>
      %29 = arith.mulf %26, %28 : vector<8x256xf32>
      %30 = arith.truncf %29 : vector<8x256xf32> to vector<8x256xbf16>
      %c0_13 = arith.constant 0 : index
      %c0_14 = arith.constant 0 : index
      %31 = vector.load %arg7[%c0_13, %c0_14] : memref<256x128xbf16, #tpu.memory_space<vmem>>, vector<256x128xbf16>
      %cst_15 = arith.constant dense<0.000000e+00> : vector<8x128xf32>
      %32 = tpu.matmul %30, %31, %cst_15 {dimension_numbers = #tpu.dot_dimension_numbers<[1], [0], [0], [1], [0, 0, 1, 1], [], []>} : vector<8x256xbf16>, vector<256x128xbf16>, vector<8x128xf32> -> vector<8x128xf32>
      %c0_16 = arith.constant 0 : index
      %c0_17 = arith.constant 0 : index
      %33 = vector.load %arg19[%c0_16, %c0_17] : memref<1x128xf32, #tpu.memory_space<vmem>>, vector<1x128xf32>
      %34 = vector.broadcast %33 : vector<1x128xf32> to vector<8x128xf32>
      %35 = arith.addf %32, %34 : vector<8x128xf32>
      %cst_18 = arith.constant 0.000000e+00 : f32
      %36 = vector.broadcast %cst_18 : f32 to vector<8x128xf32>
      %37 = arith.maximumf %35, %36 : vector<8x128xf32>
      %c0_19 = arith.constant 0 : index
      %c0_20 = arith.constant 0 : index
      %38 = vector.load %arg20[%c0_19, %c0_20] : memref<1x128xf32, #tpu.memory_space<vmem>>, vector<1x128xf32>
      %39 = vector.broadcast %38 : vector<1x128xf32> to vector<8x128xf32>
      %40 = arith.mulf %37, %39 : vector<8x128xf32>
      %41 = arith.truncf %40 : vector<8x128xf32> to vector<8x128xbf16>
      %c0_21 = arith.constant 0 : index
      %c0_22 = arith.constant 0 : index
      %42 = vector.load %arg11[%c0_21, %c0_22] : memref<128x128xbf16, #tpu.memory_space<vmem>>, vector<128x128xbf16>
      %cst_23 = arith.constant dense<0.000000e+00> : vector<8x128xf32>
      %43 = tpu.matmul %41, %42, %cst_23 {dimension_numbers = #tpu.dot_dimension_numbers<[1], [0], [0], [1], [0, 0, 1, 1], [], []>} : vector<8x128xbf16>, vector<128x128xbf16>, vector<8x128xf32> -> vector<8x128xf32>
      %c0_24 = arith.constant 0 : index
      %c0_25 = arith.constant 0 : index
      %44 = vector.load %arg21[%c0_24, %c0_25] : memref<1x128xf32, #tpu.memory_space<vmem>>, vector<1x128xf32>
      %45 = vector.broadcast %44 : vector<1x128xf32> to vector<8x128xf32>
      %46 = arith.addf %43, %45 : vector<8x128xf32>
      %cst_26 = arith.constant dense<0xFF800000> : vector<8xf32>
      %47 = vector.multi_reduction <maximumf>, %46, %cst_26 [1] : vector<8x128xf32> to vector<8xf32>
      %48 = vector.shape_cast %47 : vector<8xf32> to vector<8x1xf32>
      %49 = vector.broadcast %48 : vector<8x1xf32> to vector<8x128xf32>
      %50 = arith.subf %46, %49 : vector<8x128xf32>
      %51 = math.exp %50 : vector<8x128xf32>
      %cst_27 = arith.constant dense<0.000000e+00> : vector<8xf32>
      %52 = vector.multi_reduction <add>, %51, %cst_27 [1] : vector<8x128xf32> to vector<8xf32>
      %53 = vector.shape_cast %52 : vector<8xf32> to vector<8x1xf32>
      %54 = vector.broadcast %53 : vector<8x1xf32> to vector<8x128xf32>
      %55 = arith.divf %51, %54 : vector<8x128xf32>
      %c0_28 = arith.constant 0 : index
      %c0_29 = arith.constant 0 : index
      %56 = vector.load %arg13[%c0_28, %c0_29] : memref<8x128xf32, #tpu.memory_space<vmem>>, vector<8x128xf32>
      tpu.vector_store %arg13[%c0_28, %c0_29], %55 {strides = array<i32>} : memref<8x128xf32, #tpu.memory_space<vmem>>, vector<8x128xf32>,
    } else {
    }
    return
  }
  func.func @transform_0(%arg0: i32, %arg1: i32) -> (i32, i32) {
    %c0_i32 = arith.constant 0 : i32
    %c0_i32_0 = arith.constant 0 : i32
    return %arg1, %c0_i32 : i32, i32
  }
  func.func @transform_1(%arg0: i32, %arg1: i32) -> (i32, i32) {
    %c0_i32 = arith.constant 0 : i32
    %c0_i32_0 = arith.constant 0 : i32
    %c0_i32_1 = arith.constant 0 : i32
    return %c0_i32, %c0_i32_0 : i32, i32
  }
  func.func @transform_2(%arg0: i32, %arg1: i32) -> (i32, i32) {
    %c0_i32 = arith.constant 0 : i32
    %c0_i32_0 = arith.constant 0 : i32
    %c0_i32_1 = arith.constant 0 : i32
    return %c0_i32, %c0_i32_0 : i32, i32
  }
  func.func @transform_3(%arg0: i32, %arg1: i32) -> (i32, i32) {
    %c0_i32 = arith.constant 0 : i32
    %c0_i32_0 = arith.constant 0 : i32
    %c0_i32_1 = arith.constant 0 : i32
    return %c0_i32, %c0_i32_0 : i32, i32
  }
  func.func @transform_4(%arg0: i32, %arg1: i32) -> (i32, i32) {
    %c0_i32 = arith.constant 0 : i32
    %c0_i32_0 = arith.constant 0 : i32
    %c0_i32_1 = arith.constant 0 : i32
    return %c0_i32, %c0_i32_0 : i32, i32
  }
  func.func @transform_5(%arg0: i32, %arg1: i32) -> (i32, i32) {
    %c0_i32 = arith.constant 0 : i32
    %c0_i32_0 = arith.constant 0 : i32
    %c0_i32_1 = arith.constant 0 : i32
    return %c0_i32, %c0_i32_0 : i32, i32
  }
  func.func @transform_6(%arg0: i32, %arg1: i32) -> (i32, i32) {
    %c0_i32 = arith.constant 0 : i32
    %c0_i32_0 = arith.constant 0 : i32
    %c0_i32_1 = arith.constant 0 : i32
    return %c0_i32, %c0_i32_0 : i32, i32
  }
  func.func @transform_7(%arg0: i32, %arg1: i32) -> (i32, i32) {
    %c0_i32 = arith.constant 0 : i32
    %c0_i32_0 = arith.constant 0 : i32
    %c0_i32_1 = arith.constant 0 : i32
    return %c0_i32, %c0_i32_0 : i32, i32
  }
  func.func @transform_8(%arg0: i32, %arg1: i32) -> (i32, i32) {
    %c0_i32 = arith.constant 0 : i32
    %c0_i32_0 = arith.constant 0 : i32
    %c0_i32_1 = arith.constant 0 : i32
    return %c0_i32, %c0_i32_0 : i32, i32
  }
  func.func @transform_9(%arg0: i32, %arg1: i32) -> (i32, i32) {
    %c0_i32 = arith.constant 0 : i32
    %c0_i32_0 = arith.constant 0 : i32
    %c0_i32_1 = arith.constant 0 : i32
    return %c0_i32, %c0_i32_0 : i32, i32
  }
  func.func @transform_10(%arg0: i32, %arg1: i32) -> (i32, i32) {
    %c0_i32 = arith.constant 0 : i32
    %c0_i32_0 = arith.constant 0 : i32
    %c0_i32_1 = arith.constant 0 : i32
    return %c0_i32, %c0_i32_0 : i32, i32
  }
  func.func @transform_11(%arg0: i32, %arg1: i32) -> (i32, i32) {
    %c0_i32 = arith.constant 0 : i32
    %c0_i32_0 = arith.constant 0 : i32
    return %arg1, %c0_i32 : i32, i32
  }
}

</mosaic_0001>

<llo_original>
// kernel: pre_a_loss2_forward_padded.1
$region0: #{pre_a_loss2_forward_padded.1}
  #allocation0 [shape = 'u32[]', space=smem, size = 0x4, offset = 0x4, fixed_abs, tag = 'smem constant byte address 0x4 - core index']
  #allocation1 [shape = 'u32[72,128]{1,0:T(1,128)}', space=vmem, size = 0x9000, scoped, tag = 'internal scratch']
  #allocation2 [shape = 'f32[1,256]{1,0:T(1,128)}', space=vmem, size = 0x400, scoped, tag = 'scratch operand']
  #allocation3 [shape = 'f32[1,256]{1,0:T(1,128)}', space=vmem, size = 0x400, scoped, tag = 'scratch operand']
  #allocation4 [shape = 'f32[1,128]{1,0:T(1,128)}', space=vmem, size = 0x200, scoped, tag = 'scratch operand']
  #allocation5 [shape = 'f32[1,128]{1,0:T(1,128)}', space=vmem, size = 0x200, scoped, tag = 'scratch operand']
  #allocation6 [shape = 'f32[1,256]{1,0:T(1,128)}', space=vmem, size = 0x400, scoped, tag = 'scratch operand']
  #allocation7 [shape = 'f32[1,128]{1,0:T(1,128)}', space=vmem, size = 0x200, scoped, tag = 'scratch operand']
  #allocation8 [shape = 'f32[1,128]{1,0:T(1,128)}', space=vmem, size = 0x200, scoped, tag = 'scratch operand']
  #allocation9 [shape = 'f32[1,128]{1,0:T(1,128)}', space=vmem, size = 0x200, scoped, tag = 'scratch operand']
  %s0 = inlined_call_operand.vmem [shape: f32[16,196], index: 0, kind: input, shape index: {}]
  %s1 = inlined_call_operand.vmem [shape: bf16[196,256], index: 1, kind: input, shape index: {}]
  %s2 = inlined_call_operand.vmem [shape: f32[1,256], index: 2, kind: input, shape index: {}]
  %s3 = inlined_call_operand.vmem [shape: f32[1,256], index: 3, kind: input, shape index: {}]
  %s4 = inlined_call_operand.vmem [shape: f32[1,256], index: 4, kind: input, shape index: {}]
  %s5 = inlined_call_operand.vmem [shape: bf16[256,128], index: 5, kind: input, shape index: {}]
  %s6 = inlined_call_operand.vmem [shape: f32[1,128], index: 6, kind: input, shape index: {}]
  %s7 = inlined_call_operand.vmem [shape: f32[1,128], index: 7, kind: input, shape index: {}]
  %s8 = inlined_call_operand.vmem [shape: f32[1,128], index: 8, kind: input, shape index: {}]
  %s9 = inlined_call_operand.vmem [shape: bf16[128,128], index: 9, kind: input, shape index: {}]
  %s10 = inlined_call_operand.vmem [shape: f32[1,128], index: 10, kind: input, shape index: {}]
  %s11 = inlined_call_operand.hbm [shape: f32[16,128], index: 11, kind: output, shape index: {}]
  %s12 = sld [smem:[#allocation0]]
  $region101: #{pre_a_loss2_forward_padded.1} parent=0
    _
  %s14 = ssub.s32 1, %s12
  %s15 = scalar_select 0, %s14, %s12
  $region1: #{pre_a_loss2_forward_padded.1} parent=0
    #allocation10 [shape = 'u8[8192]{0}', space=vmem, size = 0x2000, scoped, tag = 'output window, operand 0']
    #allocation11 [shape = 's32[2]{0}', space=sflag, size = 0x8, scoped, tag = 'scoped memory for pre_a_loss2_forward_padded.1']
    %16 = vsyncpa [#allocation11], 0
    %s17 = scalar_lea.sflag [#allocation11], 1
    %18 = vsyncpa %s17, 0
    loop: start=0, step=1, limit=8
    $region2: #{pre_a_loss2_forward_padded.1} parent=1 // loop_pre_header
      _
    $region3: #{pre_a_loss2_forward_padded.1} parent=1 // loop_header
      %s20 = sphi 0, %s24
      %p21 = scmp.ge.s32.totalorder %s20, 8
      %s27 = sphi 0, %s39
      %s28 = sphi 0, %s35
      %s29 = sphi 0, %s27
      %s30 = sphi 0, %s28
      %s31 = sphi 0, %s29
      %s32 = sphi 0, %s30
      %s42 = sphi 0, %s44
      %s45 = sphi 0, %s42
      %s46 = sphi 0, %s45
      %s62 = sphi 0, %s46
      %s66 = sphi 0, %s66
      %s68 = sphi 0, %s66
      %s69 = sphi 0, %s68
      %s83 = sphi 0, %s69
      %s87 = sphi 0, %s87
      %s89 = sphi 0, %s87
      %s90 = sphi 0, %s89
      %s104 = sphi 0, %s90
      %s108 = sphi 0, %s108
      %s110 = sphi 0, %s108
      %s111 = sphi 0, %s110
      %s125 = sphi 0, %s111
      %s129 = sphi 0, %s129
      %s131 = sphi 0, %s129
      %s132 = sphi 0, %s131
      %s146 = sphi 0, %s132
      %s150 = sphi 0, %s150
      %s152 = sphi 0, %s150
      %s153 = sphi 0, %s152
      %s167 = sphi 0, %s153
      %s171 = sphi 0, %s171
      %s173 = sphi 0, %s171
      %s174 = sphi 0, %s173
      %s188 = sphi 0, %s174
      %s192 = sphi 0, %s192
      %s194 = sphi 0, %s192
      %s195 = sphi 0, %s194
      %s209 = sphi 0, %s195
      %s213 = sphi 0, %s213
      %s215 = sphi 0, %s213
      %s216 = sphi 0, %s215
      %s230 = sphi 0, %s216
      %s234 = sphi 0, %s234
      %s236 = sphi 0, %s234
      %s237 = sphi 0, %s236
      %s251 = sphi 0, %s237
      %s255 = sphi 0, %s255
      %s257 = sphi 0, %s255
      %s258 = sphi 0, %s257
      %s272 = sphi 0, %s258
      %s278 = sphi 0, %s280
      %s281 = sphi 0, %s278
      %s282 = sphi 0, %s281
      %s298 = sphi 0, %s282
    $region4: #{pre_a_loss2_forward_padded.1} parent=1 // loop_header_branch
      %23 = sbr.rel (%p21) target = $region8
    $region5: #{pre_a_loss2_forward_padded.1} parent=1 // loop_body
      %s25 = ssub.s32 %s20, 1
      %s26 = ssub.s32 %s20, 2
      %s33 = sadd.s32 1, %s28
      %p34 = scmp.ge.s32.totalorder %s33, 2
      %s35 = scalar_select %p34, 0, %s33
      %s36 = sadd.s32 1, %s27
      %s37 = scalar_select %p34, %s36, %s27
      %p38 = scmp.ge.s32.totalorder %s37, 3
      %s39 = scalar_select %p38, 0, %s37
      %s40 = ssub.s32 %s28, %s35
      %p41 = scmp.eq.s32.totalorder %s40, 0
      %s43 = sadd.s32 %s42, 1
      %s44 = scalar_select %p41, %s42, %s43
      %p47 = pneg %p41
      %p48 = scmp.eq.s32.totalorder %s20, 5
      %p49 = por %p47, %p48
      %p50 = scmp.ne.s32.totalorder %s42, %s45
      %p51 = scmp.eq.s32.totalorder %s20, 0
      %p52 = por %p50, %p51
      %p53 = scmp.ne.s32.totalorder %s42, %s45
      %p54 = scmp.eq.s32.totalorder %s25, 5
      %p55 = por %p53, %p54
      %p56 = scmp.ne.s32.totalorder %s45, %s46
      %p57 = scmp.eq.s32.totalorder %s25, 0
      %p58 = por %p56, %p57
      %p59 = scmp.ne.s32.totalorder %s45, %s46
      %p60 = scmp.eq.s32.totalorder %s26, 5
      %p61 = por %p59, %p60
      %p63 = scmp.ne.s32.totalorder %s46, %s62
      %p64 = scmp.eq.s32.totalorder %s26, 0
      %p65 = por %p63, %p64
      %s67 = sadd.s32 %s66, 1
      %p70 = scmp.eq.s32.totalorder %s20, 5
      %p71 = scmp.ne.s32.totalorder %s66, %s68
      %p72 = scmp.eq.s32.totalorder %s20, 0
      %p73 = por %p71, %p72
      %p74 = scmp.ne.s32.totalorder %s66, %s68
      %p75 = scmp.eq.s32.totalorder %s25, 5
      %p76 = por %p74, %p75
      %p77 = scmp.ne.s32.totalorder %s68, %s69
      %p78 = scmp.eq.s32.totalorder %s25, 0
      %p79 = por %p77, %p78
      %p80 = scmp.ne.s32.totalorder %s68, %s69
      %p81 = scmp.eq.s32.totalorder %s26, 5
      %p82 = por %p80, %p81
      %p84 = scmp.ne.s32.totalorder %s69, %s83
      %p85 = scmp.eq.s32.totalorder %s26, 0
      %p86 = por %p84, %p85
      %s88 = sadd.s32 %s87, 1
      %p91 = scmp.eq.s32.totalorder %s20, 5
      %p92 = scmp.ne.s32.totalorder %s87, %s89
      %p93 = scmp.eq.s32.totalorder %s20, 0
      %p94 = por %p92, %p93
      %p95 = scmp.ne.s32.totalorder %s87, %s89
      %p96 = scmp.eq.s32.totalorder %s25, 5
      %p97 = por %p95, %p96
      %p98 = scmp.ne.s32.totalorder %s89, %s90
      %p99 = scmp.eq.s32.totalorder %s25, 0
      %p100 = por %p98, %p99
      %p101 = scmp.ne.s32.totalorder %s89, %s90
      %p102 = scmp.eq.s32.totalorder %s26, 5
      %p103 = por %p101, %p102
      %p105 = scmp.ne.s32.totalorder %s90, %s104
      %p106 = scmp.eq.s32.totalorder %s26, 0
      %p107 = por %p105, %p106
      %s109 = sadd.s32 %s108, 1
      %p112 = scmp.eq.s32.totalorder %s20, 5
      %p113 = scmp.ne.s32.totalorder %s108, %s110
      %p114 = scmp.eq.s32.totalorder %s20, 0
      %p115 = por %p113, %p114
      %p116 = scmp.ne.s32.totalorder %s108, %s110
      %p117 = scmp.eq.s32.totalorder %s25, 5
      %p118 = por %p116, %p117
      %p119 = scmp.ne.s32.totalorder %s110, %s111
      %p120 = scmp.eq.s32.totalorder %s25, 0
      %p121 = por %p119, %p120
      %p122 = scmp.ne.s32.totalorder %s110, %s111
      %p123 = scmp.eq.s32.totalorder %s26, 5
      %p124 = por %p122, %p123
      %p126 = scmp.ne.s32.totalorder %s111, %s125
      %p127 = scmp.eq.s32.totalorder %s26, 0
      %p128 = por %p126, %p127
      %s130 = sadd.s32 %s129, 1
      %p133 = scmp.eq.s32.totalorder %s20, 5
      %p134 = scmp.ne.s32.totalorder %s129, %s131
      %p135 = scmp.eq.s32.totalorder %s20, 0
      %p136 = por %p134, %p135
      %p137 = scmp.ne.s32.totalorder %s129, %s131
      %p138 = scmp.eq.s32.totalorder %s25, 5
      %p139 = por %p137, %p138
      %p140 = scmp.ne.s32.totalorder %s131, %s132
      %p141 = scmp.eq.s32.totalorder %s25, 0
      %p142 = por %p140, %p141
      %p143 = scmp.ne.s32.totalorder %s131, %s132
      %p144 = scmp.eq.s32.totalorder %s26, 5
      %p145 = por %p143, %p144
      %p147 = scmp.ne.s32.totalorder %s132, %s146
      %p148 = scmp.eq.s32.totalorder %s26, 0
      %p149 = por %p147, %p148
      %s151 = sadd.s32 %s150, 1
      %p154 = scmp.eq.s32.totalorder %s20, 5
      %p155 = scmp.ne.s32.totalorder %s150, %s152
      %p156 = scmp.eq.s32.totalorder %s20, 0
      %p157 = por %p155, %p156
      %p158 = scmp.ne.s32.totalorder %s150, %s152
      %p159 = scmp.eq.s32.totalorder %s25, 5
      %p160 = por %p158, %p159
      %p161 = scmp.ne.s32.totalorder %s152, %s153
      %p162 = scmp.eq.s32.totalorder %s25, 0
      %p163 = por %p161, %p162
      %p164 = scmp.ne.s32.totalorder %s152, %s153
      %p165 = scmp.eq.s32.totalorder %s26, 5
      %p166 = por %p164, %p165
      %p168 = scmp.ne.s32.totalorder %s153, %s167
      %p169 = scmp.eq.s32.totalorder %s26, 0
      %p170 = por %p168, %p169
      %s172 = sadd.s32 %s171, 1
      %p175 = scmp.eq.s32.totalorder %s20, 5
      %p176 = scmp.ne.s32.totalorder %s171, %s173
      %p177 = scmp.eq.s32.totalorder %s20, 0
      %p178 = por %p176, %p177
      %p179 = scmp.ne.s32.totalorder %s171, %s173
      %p180 = scmp.eq.s32.totalorder %s25, 5
      %p181 = por %p179, %p180
      %p182 = scmp.ne.s32.totalorder %s173, %s174
      %p183 = scmp.eq.s32.totalorder %s25, 0
      %p184 = por %p182, %p183
      %p185 = scmp.ne.s32.totalorder %s173, %s174
      %p186 = scmp.eq.s32.totalorder %s26, 5
      %p187 = por %p185, %p186
      %p189 = scmp.ne.s32.totalorder %s174, %s188
      %p190 = scmp.eq.s32.totalorder %s26, 0
      %p191 = por %p189, %p190
      %s193 = sadd.s32 %s192, 1
      %p196 = scmp.eq.s32.totalorder %s20, 5
      %p197 = scmp.ne.s32.totalorder %s192, %s194
      %p198 = scmp.eq.s32.totalorder %s20, 0
      %p199 = por %p197, %p198
      %p200 = scmp.ne.s32.totalorder %s192, %s194
      %p201 = scmp.eq.s32.totalorder %s25, 5
      %p202 = por %p200, %p201
      %p203 = scmp.ne.s32.totalorder %s194, %s195
      %p204 = scmp.eq.s32.totalorder %s25, 0
      %p205 = por %p203, %p204
      %p206 = scmp.ne.s32.totalorder %s194, %s195
      %p207 = scmp.eq.s32.totalorder %s26, 5
      %p208 = por %p206, %p207
      %p210 = scmp.ne.s32.totalorder %s195, %s209
      %p211 = scmp.eq.s32.totalorder %s26, 0
      %p212 = por %p210, %p211
      %s214 = sadd.s32 %s213, 1
      %p217 = scmp.eq.s32.totalorder %s20, 5
      %p218 = scmp.ne.s32.totalorder %s213, %s215
      %p219 = scmp.eq.s32.totalorder %s20, 0
      %p220 = por %p218, %p219
      %p221 = scmp.ne.s32.totalorder %s213, %s215
      %p222 = scmp.eq.s32.totalorder %s25, 5
      %p223 = por %p221, %p222
      %p224 = scmp.ne.s32.totalorder %s215, %s216
      %p225 = scmp.eq.s32.totalorder %s25, 0
      %p226 = por %p224, %p225
      %p227 = scmp.ne.s32.totalorder %s215, %s216
      %p228 = scmp.eq.s32.totalorder %s26, 5
      %p229 = por %p227, %p228
      %p231 = scmp.ne.s32.totalorder %s216, %s230
      %p232 = scmp.eq.s32.totalorder %s26, 0
      %p233 = por %p231, %p232
      %s235 = sadd.s32 %s234, 1
      %p238 = scmp.eq.s32.totalorder %s20, 5
      %p239 = scmp.ne.s32.totalorder %s234, %s236
      %p240 = scmp.eq.s32.totalorder %s20, 0
      %p241 = por %p239, %p240
      %p242 = scmp.ne.s32.totalorder %s234, %s236
      %p243 = scmp.eq.s32.totalorder %s25, 5
      %p244 = por %p242, %p243
      %p245 = scmp.ne.s32.totalorder %s236, %s237
      %p246 = scmp.eq.s32.totalorder %s25, 0
      %p247 = por %p245, %p246
      %p248 = scmp.ne.s32.totalorder %s236, %s237
      %p249 = scmp.eq.s32.totalorder %s26, 5
      %p250 = por %p248, %p249
      %p252 = scmp.ne.s32.totalorder %s237, %s251
      %p253 = scmp.eq.s32.totalorder %s26, 0
      %p254 = por %p252, %p253
      %s256 = sadd.s32 %s255, 1
      %p259 = scmp.eq.s32.totalorder %s20, 5
      %p260 = scmp.ne.s32.totalorder %s255, %s257
      %p261 = scmp.eq.s32.totalorder %s20, 0
      %p262 = por %p260, %p261
      %p263 = scmp.ne.s32.totalorder %s255, %s257
      %p264 = scmp.eq.s32.totalorder %s25, 5
      %p265 = por %p263, %p264
      %p266 = scmp.ne.s32.totalorder %s257, %s258
      %p267 = scmp.eq.s32.totalorder %s25, 0
      %p268 = por %p266, %p267
      %p269 = scmp.ne.s32.totalorder %s257, %s258
      %p270 = scmp.eq.s32.totalorder %s26, 5
      %p271 = por %p269, %p270
      %p273 = scmp.ne.s32.totalorder %s258, %s272
      %p274 = scmp.eq.s32.totalorder %s26, 0
      %p275 = por %p273, %p274
      %s276 = ssub.s32 %s28, %s35
      %p277 = scmp.eq.s32.totalorder %s276, 0
      %s279 = sadd.s32 %s278, 1
      %s280 = scalar_select %p277, %s278, %s279
      %p283 = pneg %p277
      %p284 = scmp.eq.s32.totalorder %s20, 5
      %p285 = por %p283, %p284
      %p286 = scmp.ne.s32.totalorder %s278, %s281
      %p287 = scmp.eq.s32.totalorder %s20, 0
      %p288 = por %p286, %p287
      %p289 = scmp.ne.s32.totalorder %s278, %s281
      %p290 = scmp.eq.s32.totalorder %s25, 5
      %p291 = por %p289, %p290
      %p292 = scmp.ne.s32.totalorder %s281, %s282
      %p293 = scmp.eq.s32.totalorder %s25, 0
      %p294 = por %p292, %p293
      %p295 = scmp.ne.s32.totalorder %s281, %s282
      %p296 = scmp.eq.s32.totalorder %s26, 5
      %p297 = por %p295, %p296
      %p299 = scmp.ne.s32.totalorder %s282, %s298
      %p300 = scmp.eq.s32.totalorder %s26, 0
      %p301 = por %p299, %p300
      %p302 = scmp.le.s32.totalorder 1, %s20
      %p303 = scmp.lt.s32.totalorder %s20, 7
      %p304 = pnand %p302, %p303
      %p305 = pneg %p304
      // Predicated region
      $region9: #{pre_a_loss2_forward_padded.1} parent=5 // pred_check
        _
      $region10: #{pre_a_loss2_forward_padded.1} parent=5 // pred_check_branch
        %307 = sbr.rel (%p304) target = $region12
      $region11: #{pre_a_loss2_forward_padded.1} parent=5 // pred_region
        %s308 = ssub.s32 %s20, 1
        // Predicated region
        $region13: #{pre_a_loss2_forward_padded.1} parent=11 // pred_check
          %p309 = pneg %p79
        $region14: #{pre_a_loss2_forward_padded.1} parent=11 // pred_check_branch
          %311 = sbr.rel (%p309) target = $region16
        $region15: #{pre_a_loss2_forward_padded.1} parent=11 // pred_region
          _
        $region16: #{pre_a_loss2_forward_padded.1} parent=11 // pred_fallthru
          _
        // Predicated region
        $region17: #{pre_a_loss2_forward_padded.1} parent=11 // pred_check
          %p312 = pneg %p100
        $region18: #{pre_a_loss2_forward_padded.1} parent=11 // pred_check_branch
          %314 = sbr.rel (%p312) target = $region20
        $region19: #{pre_a_loss2_forward_padded.1} parent=11 // pred_region
          _
        $region20: #{pre_a_loss2_forward_padded.1} parent=11 // pred_fallthru
          _
        // Predicated region
        $region21: #{pre_a_loss2_forward_padded.1} parent=11 // pred_check
          %p315 = pneg %p121
        $region22: #{pre_a_loss2_forward_padded.1} parent=11 // pred_check_branch
          %317 = sbr.rel (%p315) target = $region24
        $region23: #{pre_a_loss2_forward_padded.1} parent=11 // pred_region
          _
        $region24: #{pre_a_loss2_forward_padded.1} parent=11 // pred_fallthru
          _
        // Predicated region
        $region25: #{pre_a_loss2_forward_padded.1} parent=11 // pred_check
          %p318 = pneg %p142
        $region26: #{pre_a_loss2_forward_padded.1} parent=11 // pred_check_branch
          %320 = sbr.rel (%p318) target = $region28
        $region27: #{pre_a_loss2_forward_padded.1} parent=11 // pred_region
          _
        $region28: #{pre_a_loss2_forward_padded.1} parent=11 // pred_fallthru
          _
        // Predicated region
        $region29: #{pre_a_loss2_forward_padded.1} parent=11 // pred_check
          %p321 = pneg %p163
        $region30: #{pre_a_loss2_forward_padded.1} parent=11 // pred_check_branch
          %323 = sbr.rel (%p321) target = $region32
        $region31: #{pre_a_loss2_forward_padded.1} parent=11 // pred_region
          _
        $region32: #{pre_a_loss2_forward_padded.1} parent=11 // pred_fallthru
          _
        // Predicated region
        $region33: #{pre_a_loss2_forward_padded.1} parent=11 // pred_check
          %p324 = pneg %p184
        $region34: #{pre_a_loss2_forward_padded.1} parent=11 // pred_check_branch
          %326 = sbr.rel (%p324) target = $region36
        $region35: #{pre_a_loss2_forward_padded.1} parent=11 // pred_region
          _
        $region36: #{pre_a_loss2_forward_padded.1} parent=11 // pred_fallthru
          _
        // Predicated region
        $region37: #{pre_a_loss2_forward_padded.1} parent=11 // pred_check
          %p327 = pneg %p205
        $region38: #{pre_a_loss2_forward_padded.1} parent=11 // pred_check_branch
          %329 = sbr.rel (%p327) target = $region40
        $region39: #{pre_a_loss2_forward_padded.1} parent=11 // pred_region
          _
        $region40: #{pre_a_loss2_forward_padded.1} parent=11 // pred_fallthru
          _
        // Predicated region
        $region41: #{pre_a_loss2_forward_padded.1} parent=11 // pred_check
          %p330 = pneg %p226
        $region42: #{pre_a_loss2_forward_padded.1} parent=11 // pred_check_branch
          %332 = sbr.rel (%p330) target = $region44
        $region43: #{pre_a_loss2_forward_padded.1} parent=11 // pred_region
          _
        $region44: #{pre_a_loss2_forward_padded.1} parent=11 // pred_fallthru
          _
        // Predicated region
        $region45: #{pre_a_loss2_forward_padded.1} parent=11 // pred_check
          %p333 = pneg %p247
        $region46: #{pre_a_loss2_forward_padded.1} parent=11 // pred_check_branch
          %335 = sbr.rel (%p333) target = $region48
        $region47: #{pre_a_loss2_forward_padded.1} parent=11 // pred_region
          _
        $region48: #{pre_a_loss2_forward_padded.1} parent=11 // pred_fallthru
          _
        // Predicated region
        $region49: #{pre_a_loss2_forward_padded.1} parent=11 // pred_check
          %p336 = pneg %p268
        $region50: #{pre_a_loss2_forward_padded.1} parent=11 // pred_check_branch
          %338 = sbr.rel (%p336) target = $region52
        $region51: #{pre_a_loss2_forward_padded.1} parent=11 // pred_region
          _
        $region52: #{pre_a_loss2_forward_padded.1} parent=11 // pred_fallthru
          _
      $region12: #{pre_a_loss2_forward_padded.1} parent=5 // pred_fallthru
        _
      %p339 = scmp.lt.s32.totalorder %s20, 6
      // Predicated region
      $region53: #{pre_a_loss2_forward_padded.1} parent=5 // pred_check
        %p340 = pneg %p339
      $region54: #{pre_a_loss2_forward_padded.1} parent=5 // pred_check_branch
        %342 = sbr.rel (%p340) target = $region56
      $region55: #{pre_a_loss2_forward_padded.1} parent=5 // pred_region
        // Predicated region
        $region57: #{pre_a_loss2_forward_padded.1} parent=55 // pred_check
          %p343 = pneg %p52
        $region58: #{pre_a_loss2_forward_padded.1} parent=55 // pred_check_branch
          %345 = sbr.rel (%p343) target = $region60
        $region59: #{pre_a_loss2_forward_padded.1} parent=55 // pred_region
          %p346 = scmp.lt.s32.totalorder %s28, 1
          %s347 = scalar_select %p346, %s28, 1
          %s348 = smul.addr %s347, 2
          %s349 = smul.addr %s348, 8
          %s350 = scalar_lea.vmem %s0, %s349
        $region60: #{pre_a_loss2_forward_padded.1} parent=55 // pred_fallthru
          _
      $region56: #{pre_a_loss2_forward_padded.1} parent=5 // pred_fallthru
        _
      %p351 = scmp.le.s32.totalorder 1, %s20
      %p352 = scmp.lt.s32.totalorder %s20, 7
      %p353 = pnand %p351, %p352
      %p354 = pneg %p353
      // Predicated region
      $region61: #{pre_a_loss2_forward_padded.1} parent=5 // pred_check
        _
      $region62: #{pre_a_loss2_forward_padded.1} parent=5 // pred_check_branch
        %356 = sbr.rel (%p353) target = $region64
      $region63: #{pre_a_loss2_forward_padded.1} parent=5 // pred_region
        %s357 = ssub.s32 %s20, 1
        %p358 = scmp.lt.s32.totalorder %s30, 1
        %s359 = scalar_select %p358, %s30, 1
        %s360 = smul.addr %s359, 2
        %s361 = smul.addr %s360, 8
        %s362 = scalar_lea.vmem %s0, %s361
        %p363 = pneg %p58
        %p364 = pneg %p55
        %p365 = pneg %p79
        %p366 = pneg %p76
        %p367 = pneg %p100
        %p368 = pneg %p97
        %p369 = pneg %p121
        %p370 = pneg %p118
        %p371 = pneg %p142
        %p372 = pneg %p139
        %p373 = pneg %p163
        %p374 = pneg %p160
        %p375 = pneg %p184
        %p376 = pneg %p181
        %p377 = pneg %p205
        %p378 = pneg %p202
        %p379 = pneg %p226
        %p380 = pneg %p223
        %p381 = pneg %p247
        %p382 = pneg %p244
        %p383 = pneg %p268
        %p384 = pneg %p265
        %p385 = pneg %p294
        %p386 = pneg %p291
        %s387 = sand.u32 %s281, 1
        %s388 = scalar_lea.sflag [#allocation11], %s387
        %s389 = sand.u32 %s281, 1
        %s390 = smul.addr %s389, 8
        %s391 = scalar_lea.vmem [#allocation10], %s390
        %p392 = scmp.lt.s32.totalorder %s30, 1
        %s393 = scalar_select %p392, %s30, 1
        %s394 = smul.addr %s393, 2
        %s395 = smul.addr %s394, 8
        %s396 = scalar_lea.vmem %s0, %s395
        %s398 = smul.u32 %s30, 8
        %v399 = vlaneseq
        %v400 = vshrl.u32 %v399, 7
        %v401 = vstv %s398
        %v402 = vadd.s32 %v401, %v400
        %vm403 = vcmp.lt.s32.totalorder %v402, 16
        %p404 = scmp.eq.s32.totalorder %s29, 0
        // Predicated region
        $region65: #{pre_a_loss2_forward_padded.1} parent=63 // pred_check
          %p405 = pneg %p404
        $region66: #{pre_a_loss2_forward_padded.1} parent=63 // pred_check_branch
          %407 = sbr.rel (%p405) target = $region68
        $region67: #{pre_a_loss2_forward_padded.1} parent=63 // pred_region
          %p408 = scmp.eq.s32.totalorder %s30, 0
          // Predicated region
          $region69: #{pre_a_loss2_forward_padded.1} parent=67 // pred_check
            %p409 = pneg %p408
          $region70: #{pre_a_loss2_forward_padded.1} parent=67 // pred_check_branch
            %411 = sbr.rel (%p409) target = $region72
          $region71: #{pre_a_loss2_forward_padded.1} parent=67 // pred_region
            %v412 = vlaneseq
            %vm413 = vcmp.ge.s32.totalorder %v412, 0
            %vm414 = vcmp.lt.s32.totalorder %v412, 256
            %vm415 = vmand %vm413, %vm414
            %416 = vst.msk [vmem:[#allocation2] sm:$0x3] %vm415, 0.0
            %417 = vst.msk [vmem:[#allocation3] sm:$0x3] %vm415, 0.0
            %418 = vst [vmem:[#allocation4] sm:$0x1] 0.0
            %419 = vst [vmem:[#allocation5] sm:$0x1] 0.0
          $region72: #{pre_a_loss2_forward_padded.1} parent=67 // pred_fallthru
            _
          %v420 = vld [vmem:[%s396] sm:$0xff]
          %v421 = vld [vmem:[%s396 + $0x8] sm:$0xff]
          %v422 = vpack.c.bf16 %v420, %v420
          %v423 = vpack.c.bf16 %v421, %v421
          %v424 = vld [vmem:[%s1] sm:$0xff]
          %v425 = vld [vmem:[%s1 + $0x8] sm:$0xff]
          %v426 = vld [vmem:[%s1 + $0x10] sm:$0xff]
          %v427 = vld [vmem:[%s1 + $0x18] sm:$0xff]
          %v428 = vld [vmem:[%s1 + $0x20] sm:$0xff]
          %v429 = vld [vmem:[%s1 + $0x28] sm:$0xff]
          %v430 = vld [vmem:[%s1 + $0x30] sm:$0xff]
          %v431 = vld [vmem:[%s1 + $0x38] sm:$0xff]
          %v432 = vld [vmem:[%s1 + $0x40] sm:$0xff]
          %v433 = vld [vmem:[%s1 + $0x48] sm:$0xff]
          %v434 = vld [vmem:[%s1 + $0x50] sm:$0xff]
          %v435 = vld [vmem:[%s1 + $0x58] sm:$0xff]
          %v436 = vld [vmem:[%s1 + $0x60] sm:$0xff]
          %v437 = vld [vmem:[%s1 + $0x68] sm:$0xff]
          %v438 = vld [vmem:[%s1 + $0x70] sm:$0xff]
          %v439 = vld [vmem:[%s1 + $0x78] sm:$0xff]
          %v440 = vld [vmem:[%s1 + $0x80] sm:$0xff]
          %v441 = vld [vmem:[%s1 + $0x88] sm:$0xff]
          %v442 = vld [vmem:[%s1 + $0x90] sm:$0xff]
          %v443 = vld [vmem:[%s1 + $0x98] sm:$0xff]
          %v444 = vld [vmem:[%s1 + $0xa0] sm:$0xff]
          %v445 = vld [vmem:[%s1 + $0xa8] sm:$0xff]
          %v446 = vld [vmem:[%s1 + $0xb0] sm:$0xff]
          %v447 = vld [vmem:[%s1 + $0xb8] sm:$0xff]
          %v448 = vld [vmem:[%s1 + $0xc0] sm:$0x33]
          %v449 = vld [vmem:[%s2] sm:$0x3]
          %v451 = vperm.slane %v449, 0
          %v452 = vperm.slane %v449, 1
          %v480 = vunpack.c.l.b16 %v424
          %v481 = vunpack.c.h.b16 %v424
          %v482 = vunpack.c.l.b16 %v425
          %v483 = vunpack.c.h.b16 %v425
          %v484 = vunpack.c.l.b16 %v426
          %v485 = vunpack.c.h.b16 %v426
          %v486 = vunpack.c.l.b16 %v427
          %v487 = vunpack.c.h.b16 %v427
          %v488 = vunpack.c.l.b16 %v428
          %v489 = vunpack.c.h.b16 %v428
          %v490 = vunpack.c.l.b16 %v429
          %v491 = vunpack.c.h.b16 %v429
          %v492 = vunpack.c.l.b16 %v430
          %v493 = vunpack.c.h.b16 %v430
          %v494 = vunpack.c.l.b16 %v431
          %v495 = vunpack.c.h.b16 %v431
          %v496 = vunpack.c.l.b16 %v432
          %v497 = vunpack.c.h.b16 %v432
          %v498 = vunpack.c.l.b16 %v433
          %v499 = vunpack.c.h.b16 %v433
          %v500 = vunpack.c.l.b16 %v434
          %v501 = vunpack.c.h.b16 %v434
          %v502 = vunpack.c.l.b16 %v435
          %v503 = vunpack.c.h.b16 %v435
          %v504 = vunpack.c.l.b16 %v436
          %v505 = vunpack.c.h.b16 %v436
          %v506 = vunpack.c.l.b16 %v437
          %v507 = vunpack.c.h.b16 %v437
          %v508 = vunpack.c.l.b16 %v438
          %v509 = vunpack.c.h.b16 %v438
          %v510 = vunpack.c.l.b16 %v439
          %v511 = vunpack.c.h.b16 %v439
          %v512 = vunpack.c.l.b16 %v440
          %v513 = vunpack.c.h.b16 %v440
          %v514 = vunpack.c.l.b16 %v441
          %v515 = vunpack.c.h.b16 %v441
          %v516 = vunpack.c.l.b16 %v442
          %v517 = vunpack.c.h.b16 %v442
          %v518 = vunpack.c.l.b16 %v443
          %v519 = vunpack.c.h.b16 %v443
          %v520 = vunpack.c.l.b16 %v444
          %v521 = vunpack.c.h.b16 %v444
          %v522 = vunpack.c.l.b16 %v445
          %v523 = vunpack.c.h.b16 %v445
          %v524 = vunpack.c.l.b16 %v446
          %v525 = vunpack.c.h.b16 %v446
          %v526 = vunpack.c.l.b16 %v447
          %v527 = vunpack.c.h.b16 %v447
          %v528 = vunpack.c.l.b16 %v448
          %v529 = vunpack.c.h.b16 %v448
          %v530 = vpack.c.b16 %v482, %v480
          %v531 = vpack.c.b16 %v483, %v481
          %v532 = vpack.c.b16 %v486, %v484
          %v533 = vpack.c.b16 %v487, %v485
          %v534 = vpack.c.b16 %v490, %v488
          %v535 = vpack.c.b16 %v491, %v489
          %v536 = vpack.c.b16 %v494, %v492
          %v537 = vpack.c.b16 %v495, %v493
          %v538 = vpack.c.b16 %v498, %v496
          %v539 = vpack.c.b16 %v499, %v497
          %v540 = vpack.c.b16 %v502, %v500
          %v541 = vpack.c.b16 %v503, %v501
          %v542 = vpack.c.b16 %v506, %v504
          %v543 = vpack.c.b16 %v507, %v505
          %v544 = vpack.c.b16 %v510, %v508
          %v545 = vpack.c.b16 %v511, %v509
          %v546 = vpack.c.b16 %v514, %v512
          %v547 = vpack.c.b16 %v515, %v513
          %v548 = vpack.c.b16 %v518, %v516
          %v549 = vpack.c.b16 %v519, %v517
          %v550 = vpack.c.b16 %v522, %v520
          %v551 = vpack.c.b16 %v523, %v521
          %v552 = vpack.c.b16 %v526, %v524
          %v553 = vpack.c.b16 %v527, %v525
          %v554 = vpack.c.b16 %v528, %v528
          %v555 = vpack.c.b16 %v529, %v529
          %vm580 = vcmask 556032
          %v582 = vsel %vm580, %v423, 0
          %vm584 = vcmask 1041408
          %v586 = vsel %vm584, %v554, 0
          %v589 = vsel %vm584, %v555, 0
          %591 = vmatpush.bf16.msra.mxu0 %v544
          %592 = vmatpush.bf16.msra.mxu0 %v542
          %593 = vmatpush.bf16.msra.mxu0 %v540
          %594 = vmatpush.bf16.msra.mxu0 %v538
          %595 = vmatpush.bf16.msra.mxu0 %v536
          %596 = vmatpush.bf16.msra.mxu0 %v534
          %597 = vmatpush.bf16.msra.mxu0 %v532
          %598 = vmatpush.bf16.msra.mxu0 %v530
          %599 = vmatmul.bf16.gmra.mxu0 %v422
          %v600 = vpop.f32.mrf.mxu0
          %v601 = vadd.f32 %v451, %v600
          %v602 = vpop.f32.mrf.mxu0
          %603 = vdwg.mxu0
          %604 = vmatpush.bf16.msra.mxu0 0
          %605 = vmatpush.bf16.msra.mxu0 0
          %606 = vmatpush.bf16.msra.mxu0 0
          %607 = vmatpush.bf16.msra.mxu0 %v586
          %608 = vmatpush.bf16.msra.mxu0 %v552
          %609 = vmatpush.bf16.msra.mxu0 %v550
          %610 = vmatpush.bf16.msra.mxu0 %v548
          %611 = vmatpush.bf16.msra.mxu0 %v546
          %612 = vmatmul.bf16.gmra.mxu0 %v582
          %v613 = vpop.f32.mrf.mxu0
          %v614 = vadd.f32 %v601, %v613
          %v615 = vpop.f32.mrf.mxu0
          %616 = vdwg.mxu0
          %617 = vmatpush.bf16.msra.mxu0 %v545
          %618 = vmatpush.bf16.msra.mxu0 %v543
          %619 = vmatpush.bf16.msra.mxu0 %v541
          %620 = vmatpush.bf16.msra.mxu0 %v539
          %621 = vmatpush.bf16.msra.mxu0 %v537
          %622 = vmatpush.bf16.msra.mxu0 %v535
          %623 = vmatpush.bf16.msra.mxu0 %v533
          %624 = vmatpush.bf16.msra.mxu0 %v531
          %625 = vmatmul.bf16.gmra.mxu0 %v422
          %v626 = vpop.f32.mrf.mxu0
          %v627 = vadd.f32 %v452, %v626
          %v628 = vpop.f32.mrf.mxu0
          %629 = vdwg.mxu0
          %630 = vmatpush.bf16.msra.mxu0 0
          %631 = vmatpush.bf16.msra.mxu0 0
          %632 = vmatpush.bf16.msra.mxu0 0
          %633 = vmatpush.bf16.msra.mxu0 %v589
          %634 = vmatpush.bf16.msra.mxu0 %v553
          %635 = vmatpush.bf16.msra.mxu0 %v551
          %636 = vmatpush.bf16.msra.mxu0 %v549
          %637 = vmatpush.bf16.msra.mxu0 %v547
          %638 = vmatmul.bf16.gmra.mxu0 %v582
          %v639 = vpop.f32.mrf.mxu0
          %v640 = vadd.f32 %v627, %v639
          %v641 = vpop.f32.mrf.mxu0
          %642 = vdwg.mxu0
          %v643 = vmax.f32 %v614, 0.0
          %v644 = vmax.f32 %v640, 0.0
          %v645 = vsel %vm403, 1, 0
          %vm646 = vcmp.eq.s32.totalorder %v645, 1
          %v647 = vsel %vm646, %v643, 0.0
          %v648 = vsel %vm646, %v644, 0.0
          %v649 = vld [vmem:[#allocation2] sm:$0x3]
          %v650 = vrot.slane %v647, 4
          %v651 = vadd.f32 %v647, %v650
          %v652 = vrot.slane %v651, 2
          %v653 = vadd.f32 %v651, %v652
          %v654 = vrot.slane %v653, 1
          %v655 = vadd.f32 %v653, %v654
          %v656 = vrot.slane %v648, 4
          %v657 = vadd.f32 %v648, %v656
          %v658 = vrot.slane %v657, 2
          %v659 = vadd.f32 %v657, %v658
          %v660 = vrot.slane %v659, 1
          %v661 = vadd.f32 %v659, %v660
          %v664 = vrot.slane %v661, 7
          %vm665 = vcmask 1040384
          %v666 = vsel %vm665, %v655, %v664
          %v668 = vadd.f32 %v649, %v666
          %v669 = vlaneseq
          %vm670 = vcmp.ge.s32.totalorder %v669, 0
          %vm671 = vcmp.lt.s32.totalorder %v669, 256
          %vm672 = vmand %vm670, %vm671
          %673 = vst.msk [vmem:[#allocation2] sm:$0x3] %vm672, %v668
          %v674 = vld [vmem:[#allocation3] sm:$0x3]
          %v675 = vmul.f32 %v647, %v647
          %v676 = vmul.f32 %v648, %v648
          %v677 = vrot.slane %v675, 4
          %v678 = vadd.f32 %v675, %v677
          %v679 = vrot.slane %v678, 2
          %v680 = vadd.f32 %v678, %v679
          %v681 = vrot.slane %v680, 1
          %v682 = vadd.f32 %v680, %v681
          %v683 = vrot.slane %v676, 4
          %v684 = vadd.f32 %v676, %v683
          %v685 = vrot.slane %v684, 2
          %v686 = vadd.f32 %v684, %v685
          %v687 = vrot.slane %v686, 1
          %v688 = vadd.f32 %v686, %v687
          %v691 = vrot.slane %v688, 7
          %v692 = vsel %vm665, %v682, %v691
          %v694 = vadd.f32 %v674, %v692
          %695 = vst.msk [vmem:[#allocation3] sm:$0x3] %vm672, %v694
        $region68: #{pre_a_loss2_forward_padded.1} parent=63 // pred_fallthru
          _
        %p696 = scmp.eq.s32.totalorder %s29, 1
        // Predicated region
        $region73: #{pre_a_loss2_forward_padded.1} parent=63 // pred_check
          %p697 = pneg %p696
        $region74: #{pre_a_loss2_forward_padded.1} parent=63 // pred_check_branch
          %699 = sbr.rel (%p697) target = $region76
        $region75: #{pre_a_loss2_forward_padded.1} parent=63 // pred_region
          %p700 = scmp.eq.s32.totalorder %s30, 0
          // Predicated region
          $region77: #{pre_a_loss2_forward_padded.1} parent=75 // pred_check
            %p701 = pneg %p700
          $region78: #{pre_a_loss2_forward_padded.1} parent=75 // pred_check_branch
            %703 = sbr.rel (%p701) target = $region80
          $region79: #{pre_a_loss2_forward_padded.1} parent=75 // pred_region
            %v704 = vld [vmem:[#allocation2] sm:$0x3]
            %v705 = vmul.f32 %v704, 0.0625
            %v706 = vld [vmem:[#allocation3] sm:$0x3]
            %v707 = vmul.f32 %v706, 0.0625
            %v708 = vmul.f32 %v705, %v705
            %v709 = vsub.f32 %v707, %v708
            %v710 = vmax.f32 %v709, 0.0
            %v711 = vld [vmem:[%s3] sm:$0x3]
            %v712 = vadd.f32 %v710, 1e-05
            %v713 = vrsqrt.pop %v712
            %v714 = vmul.f32 %v713, %v712
            %v715 = vmul.f32 %v714, %v713
            %v716 = vmul.f32 0.5, %v715
            %v717 = vsub.f32 1.5, %v716
            %v718 = vmul.f32 %v713, %v717
            %vm719 = vweird.f32 %v712
            %vm720 = vweird.f32 %v713
            %vm721 = vmor %vm719, %vm720
            %v722 = vsel %vm721, %v713, %v718
            %v723 = vmul.f32 %v711, %v722
            %v724 = vld [vmem:[%s4] sm:$0x3]
            %v725 = vmul.f32 %v705, %v723
            %v726 = vsub.f32 %v724, %v725
            %v727 = vlaneseq
            %vm728 = vcmp.ge.s32.totalorder %v727, 0
            %vm729 = vcmp.lt.s32.totalorder %v727, 256
            %vm730 = vmand %vm728, %vm729
            %731 = vst.msk [vmem:[#allocation6] sm:$0x3] %vm730, %v723
            %v732 = vld [vmem:[%s6] sm:$0x1]
            %v733 = vld [vmem:[%s5] sm:$0xf]
            %v734 = vld [vmem:[%s5 + $0x4] sm:$0xf]
            %v735 = vld [vmem:[%s5 + $0x8] sm:$0xf]
            %v736 = vld [vmem:[%s5 + $0xc] sm:$0xf]
            %v737 = vld [vmem:[%s5 + $0x10] sm:$0xf]
            %v738 = vld [vmem:[%s5 + $0x14] sm:$0xf]
            %v739 = vld [vmem:[%s5 + $0x18] sm:$0xf]
            %v740 = vld [vmem:[%s5 + $0x1c] sm:$0xf]
            %v741 = vld [vmem:[%s5 + $0x20] sm:$0xf]
            %v742 = vld [vmem:[%s5 + $0x24] sm:$0xf]
            %v743 = vld [vmem:[%s5 + $0x28] sm:$0xf]
            %v744 = vld [vmem:[%s5 + $0x2c] sm:$0xf]
            %v745 = vld [vmem:[%s5 + $0x30] sm:$0xf]
            %v746 = vld [vmem:[%s5 + $0x34] sm:$0xf]
            %v747 = vld [vmem:[%s5 + $0x38] sm:$0xf]
            %v748 = vld [vmem:[%s5 + $0x3c] sm:$0xf]
            %v749 = vld [vmem:[%s5 + $0x40] sm:$0xf]
            %v750 = vld [vmem:[%s5 + $0x44] sm:$0xf]
            %v751 = vld [vmem:[%s5 + $0x48] sm:$0xf]
            %v752 = vld [vmem:[%s5 + $0x4c] sm:$0xf]
            %v753 = vld [vmem:[%s5 + $0x50] sm:$0xf]
            %v754 = vld [vmem:[%s5 + $0x54] sm:$0xf]
            %v755 = vld [vmem:[%s5 + $0x58] sm:$0xf]
            %v756 = vld [vmem:[%s5 + $0x5c] sm:$0xf]
            %v757 = vld [vmem:[%s5 + $0x60] sm:$0xf]
            %v758 = vld [vmem:[%s5 + $0x64] sm:$0xf]
            %v759 = vld [vmem:[%s5 + $0x68] sm:$0xf]
            %v760 = vld [vmem:[%s5 + $0x6c] sm:$0xf]
            %v761 = vld [vmem:[%s5 + $0x70] sm:$0xf]
            %v762 = vld [vmem:[%s5 + $0x74] sm:$0xf]
            %v763 = vld [vmem:[%s5 + $0x78] sm:$0xf]
            %v764 = vld [vmem:[%s5 + $0x7c] sm:$0xf]
            %v765 = vunpack.c.l.bf16 %v733
            %v766 = vunpack.c.l.bf16 %v734
            %v767 = vunpack.c.l.bf16 %v735
            %v768 = vunpack.c.l.bf16 %v736
            %v769 = vunpack.c.l.bf16 %v737
            %v770 = vunpack.c.l.bf16 %v738
            %v771 = vunpack.c.l.bf16 %v739
            %v772 = vunpack.c.l.bf16 %v740
            %v773 = vunpack.c.l.bf16 %v741
            %v774 = vunpack.c.l.bf16 %v742
            %v775 = vunpack.c.l.bf16 %v743
            %v776 = vunpack.c.l.bf16 %v744
            %v777 = vunpack.c.l.bf16 %v745
            %v778 = vunpack.c.l.bf16 %v746
            %v779 = vunpack.c.l.bf16 %v747
            %v780 = vunpack.c.l.bf16 %v748
            %v781 = vunpack.c.l.bf16 %v749
            %v782 = vunpack.c.l.bf16 %v750
            %v783 = vunpack.c.l.bf16 %v751
            %v784 = vunpack.c.l.bf16 %v752
            %v785 = vunpack.c.l.bf16 %v753
            %v786 = vunpack.c.l.bf16 %v754
            %v787 = vunpack.c.l.bf16 %v755
            %v788 = vunpack.c.l.bf16 %v756
            %v789 = vunpack.c.l.bf16 %v757
            %v790 = vunpack.c.l.bf16 %v758
            %v791 = vunpack.c.l.bf16 %v759
            %v792 = vunpack.c.l.bf16 %v760
            %v793 = vunpack.c.l.bf16 %v761
            %v794 = vunpack.c.l.bf16 %v762
            %v795 = vunpack.c.l.bf16 %v763
            %v796 = vunpack.c.l.bf16 %v764
            %v798 = vperm.slane %v726, 0
            %v799 = vperm.slane %v726, 1
            %802 = vmatpush.msra.mxu0 %v780
            %803 = vmatpush.msra.mxu0 %v779
            %804 = vmatpush.msra.mxu0 %v778
            %805 = vmatpush.msra.mxu0 %v777
            %806 = vmatpush.msra.mxu0 %v776
            %807 = vmatpush.msra.mxu0 %v775
            %808 = vmatpush.msra.mxu0 %v774
            %809 = vmatpush.msra.mxu0 %v773
            %810 = vmatpush.msra.mxu0 %v772
            %811 = vmatpush.msra.mxu0 %v771
            %812 = vmatpush.msra.mxu0 %v770
            %813 = vmatpush.msra.mxu0 %v769
            %814 = vmatpush.msra.mxu0 %v768
            %815 = vmatpush.msra.mxu0 %v767
            %816 = vmatpush.msra.mxu0 %v766
            %817 = vmatpush.msra.mxu0 %v765
            %818 = vmatmul.f32.gmra.mxu0 %v798
            %v819 = vpop.f32.mrf.mxu0
            %v820 = vadd.f32 0.0, %v819
            %821 = vdwg.mxu0
            %822 = vmatpush.msra.mxu0 %v796
            %823 = vmatpush.msra.mxu0 %v795
            %824 = vmatpush.msra.mxu0 %v794
            %825 = vmatpush.msra.mxu0 %v793
            %826 = vmatpush.msra.mxu0 %v792
            %827 = vmatpush.msra.mxu0 %v791
            %828 = vmatpush.msra.mxu0 %v790
            %829 = vmatpush.msra.mxu0 %v789
            %830 = vmatpush.msra.mxu0 %v788
            %831 = vmatpush.msra.mxu0 %v787
            %832 = vmatpush.msra.mxu0 %v786
            %833 = vmatpush.msra.mxu0 %v785
            %834 = vmatpush.msra.mxu0 %v784
            %835 = vmatpush.msra.mxu0 %v783
            %836 = vmatpush.msra.mxu0 %v782
            %837 = vmatpush.msra.mxu0 %v781
            %838 = vmatmul.f32.gmra.mxu0 %v799
            %v839 = vpop.f32.mrf.mxu0
            %v840 = vadd.f32 %v820, %v839
            %841 = vdwg.mxu0
            %v842 = vadd.f32 %v732, %v840
            %843 = vst [vmem:[#allocation7] sm:$0x1] %v842
          $region80: #{pre_a_loss2_forward_padded.1} parent=75 // pred_fallthru
            _
          %v844 = vld [vmem:[%s396] sm:$0xff]
          %v845 = vld [vmem:[%s396 + $0x8] sm:$0xff]
          %v846 = vpack.c.bf16 %v844, %v844
          %v847 = vpack.c.bf16 %v845, %v845
          %v848 = vld [vmem:[%s1] sm:$0xff]
          %v849 = vld [vmem:[%s1 + $0x8] sm:$0xff]
          %v850 = vld [vmem:[%s1 + $0x10] sm:$0xff]
          %v851 = vld [vmem:[%s1 + $0x18] sm:$0xff]
          %v852 = vld [vmem:[%s1 + $0x20] sm:$0xff]
          %v853 = vld [vmem:[%s1 + $0x28] sm:$0xff]
          %v854 = vld [vmem:[%s1 + $0x30] sm:$0xff]
          %v855 = vld [vmem:[%s1 + $0x38] sm:$0xff]
          %v856 = vld [vmem:[%s1 + $0x40] sm:$0xff]
          %v857 = vld [vmem:[%s1 + $0x48] sm:$0xff]
          %v858 = vld [vmem:[%s1 + $0x50] sm:$0xff]
          %v859 = vld [vmem:[%s1 + $0x58] sm:$0xff]
          %v860 = vld [vmem:[%s1 + $0x60] sm:$0xff]
          %v861 = vld [vmem:[%s1 + $0x68] sm:$0xff]
          %v862 = vld [vmem:[%s1 + $0x70] sm:$0xff]
          %v863 = vld [vmem:[%s1 + $0x78] sm:$0xff]
          %v864 = vld [vmem:[%s1 + $0x80] sm:$0xff]
          %v865 = vld [vmem:[%s1 + $0x88] sm:$0xff]
          %v866 = vld [vmem:[%s1 + $0x90] sm:$0xff]
          %v867 = vld [vmem:[%s1 + $0x98] sm:$0xff]
          %v868 = vld [vmem:[%s1 + $0xa0] sm:$0xff]
          %v869 = vld [vmem:[%s1 + $0xa8] sm:$0xff]
          %v870 = vld [vmem:[%s1 + $0xb0] sm:$0xff]
          %v871 = vld [vmem:[%s1 + $0xb8] sm:$0xff]
          %v872 = vld [vmem:[%s1 + $0xc0] sm:$0x33]
          %v873 = vld [vmem:[%s2] sm:$0x3]
          %v875 = vperm.slane %v873, 0
          %v876 = vperm.slane %v873, 1
          %v904 = vunpack.c.l.b16 %v848
          %v905 = vunpack.c.h.b16 %v848
          %v906 = vunpack.c.l.b16 %v849
          %v907 = vunpack.c.h.b16 %v849
          %v908 = vunpack.c.l.b16 %v850
          %v909 = vunpack.c.h.b16 %v850
          %v910 = vunpack.c.l.b16 %v851
          %v911 = vunpack.c.h.b16 %v851
          %v912 = vunpack.c.l.b16 %v852
          %v913 = vunpack.c.h.b16 %v852
          %v914 = vunpack.c.l.b16 %v853
          %v915 = vunpack.c.h.b16 %v853
          %v916 = vunpack.c.l.b16 %v854
          %v917 = vunpack.c.h.b16 %v854
          %v918 = vunpack.c.l.b16 %v855
          %v919 = vunpack.c.h.b16 %v855
          %v920 = vunpack.c.l.b16 %v856
          %v921 = vunpack.c.h.b16 %v856
          %v922 = vunpack.c.l.b16 %v857
          %v923 = vunpack.c.h.b16 %v857
          %v924 = vunpack.c.l.b16 %v858
          %v925 = vunpack.c.h.b16 %v858
          %v926 = vunpack.c.l.b16 %v859
          %v927 = vunpack.c.h.b16 %v859
          %v928 = vunpack.c.l.b16 %v860
          %v929 = vunpack.c.h.b16 %v860
          %v930 = vunpack.c.l.b16 %v861
          %v931 = vunpack.c.h.b16 %v861
          %v932 = vunpack.c.l.b16 %v862
          %v933 = vunpack.c.h.b16 %v862
          %v934 = vunpack.c.l.b16 %v863
          %v935 = vunpack.c.h.b16 %v863
          %v936 = vunpack.c.l.b16 %v864
          %v937 = vunpack.c.h.b16 %v864
          %v938 = vunpack.c.l.b16 %v865
          %v939 = vunpack.c.h.b16 %v865
          %v940 = vunpack.c.l.b16 %v866
          %v941 = vunpack.c.h.b16 %v866
          %v942 = vunpack.c.l.b16 %v867
          %v943 = vunpack.c.h.b16 %v867
          %v944 = vunpack.c.l.b16 %v868
          %v945 = vunpack.c.h.b16 %v868
          %v946 = vunpack.c.l.b16 %v869
          %v947 = vunpack.c.h.b16 %v869
          %v948 = vunpack.c.l.b16 %v870
          %v949 = vunpack.c.h.b16 %v870
          %v950 = vunpack.c.l.b16 %v871
          %v951 = vunpack.c.h.b16 %v871
          %v952 = vunpack.c.l.b16 %v872
          %v953 = vunpack.c.h.b16 %v872
          %v954 = vpack.c.b16 %v906, %v904
          %v955 = vpack.c.b16 %v907, %v905
          %v956 = vpack.c.b16 %v910, %v908
          %v957 = vpack.c.b16 %v911, %v909
          %v958 = vpack.c.b16 %v914, %v912
          %v959 = vpack.c.b16 %v915, %v913
          %v960 = vpack.c.b16 %v918, %v916
          %v961 = vpack.c.b16 %v919, %v917
          %v962 = vpack.c.b16 %v922, %v920
          %v963 = vpack.c.b16 %v923, %v921
          %v964 = vpack.c.b16 %v926, %v924
          %v965 = vpack.c.b16 %v927, %v925
          %v966 = vpack.c.b16 %v930, %v928
          %v967 = vpack.c.b16 %v931, %v929
          %v968 = vpack.c.b16 %v934, %v932
          %v969 = vpack.c.b16 %v935, %v933
          %v970 = vpack.c.b16 %v938, %v936
          %v971 = vpack.c.b16 %v939, %v937
          %v972 = vpack.c.b16 %v942, %v940
          %v973 = vpack.c.b16 %v943, %v941
          %v974 = vpack.c.b16 %v946, %v944
          %v975 = vpack.c.b16 %v947, %v945
          %v976 = vpack.c.b16 %v950, %v948
          %v977 = vpack.c.b16 %v951, %v949
          %v978 = vpack.c.b16 %v952, %v952
          %v979 = vpack.c.b16 %v953, %v953
          %vm1004 = vcmask 556032
          %v1006 = vsel %vm1004, %v847, 0
          %vm1008 = vcmask 1041408
          %v1010 = vsel %vm1008, %v978, 0
          %v1013 = vsel %vm1008, %v979, 0
          %1015 = vmatpush.bf16.msra.mxu0 %v968
          %1016 = vmatpush.bf16.msra.mxu0 %v966
          %1017 = vmatpush.bf16.msra.mxu0 %v964
          %1018 = vmatpush.bf16.msra.mxu0 %v962
          %1019 = vmatpush.bf16.msra.mxu0 %v960
          %1020 = vmatpush.bf16.msra.mxu0 %v958
          %1021 = vmatpush.bf16.msra.mxu0 %v956
          %1022 = vmatpush.bf16.msra.mxu0 %v954
          %1023 = vmatmul.bf16.gmra.mxu0 %v846
          %v1024 = vpop.f32.mrf.mxu0
          %v1025 = vadd.f32 %v875, %v1024
          %v1026 = vpop.f32.mrf.mxu0
          %1027 = vdwg.mxu0
          %1028 = vmatpush.bf16.msra.mxu0 0
          %1029 = vmatpush.bf16.msra.mxu0 0
          %1030 = vmatpush.bf16.msra.mxu0 0
          %1031 = vmatpush.bf16.msra.mxu0 %v1010
          %1032 = vmatpush.bf16.msra.mxu0 %v976
          %1033 = vmatpush.bf16.msra.mxu0 %v974
          %1034 = vmatpush.bf16.msra.mxu0 %v972
          %1035 = vmatpush.bf16.msra.mxu0 %v970
          %1036 = vmatmul.bf16.gmra.mxu0 %v1006
          %v1037 = vpop.f32.mrf.mxu0
          %v1038 = vadd.f32 %v1025, %v1037
          %v1039 = vpop.f32.mrf.mxu0
          %1040 = vdwg.mxu0
          %1041 = vmatpush.bf16.msra.mxu0 %v969
          %1042 = vmatpush.bf16.msra.mxu0 %v967
          %1043 = vmatpush.bf16.msra.mxu0 %v965
          %1044 = vmatpush.bf16.msra.mxu0 %v963
          %1045 = vmatpush.bf16.msra.mxu0 %v961
          %1046 = vmatpush.bf16.msra.mxu0 %v959
          %1047 = vmatpush.bf16.msra.mxu0 %v957
          %1048 = vmatpush.bf16.msra.mxu0 %v955
          %1049 = vmatmul.bf16.gmra.mxu0 %v846
          %v1050 = vpop.f32.mrf.mxu0
          %v1051 = vadd.f32 %v876, %v1050
          %v1052 = vpop.f32.mrf.mxu0
          %1053 = vdwg.mxu0
          %1054 = vmatpush.bf16.msra.mxu0 0
          %1055 = vmatpush.bf16.msra.mxu0 0
          %1056 = vmatpush.bf16.msra.mxu0 0
          %1057 = vmatpush.bf16.msra.mxu0 %v1013
          %1058 = vmatpush.bf16.msra.mxu0 %v977
          %1059 = vmatpush.bf16.msra.mxu0 %v975
          %1060 = vmatpush.bf16.msra.mxu0 %v973
          %1061 = vmatpush.bf16.msra.mxu0 %v971
          %1062 = vmatmul.bf16.gmra.mxu0 %v1006
          %v1063 = vpop.f32.mrf.mxu0
          %v1064 = vadd.f32 %v1051, %v1063
          %v1065 = vpop.f32.mrf.mxu0
          %1066 = vdwg.mxu0
          %v1067 = vmax.f32 %v1038, 0.0
          %v1068 = vmax.f32 %v1064, 0.0
          %v1069 = vld [vmem:[#allocation6] sm:$0x3]
          %v1071 = vperm.slane %v1069, 0
          %v1072 = vperm.slane %v1069, 1
          %v1075 = vmul.f32 %v1067, %v1071
          %v1076 = vmul.f32 %v1068, %v1072
          %v1077 = vpack.c.bf16 %v1075, %v1075
          %v1078 = vpack.c.bf16 %v1076, %v1076
          %v1079 = vld [vmem:[%s5] sm:$0xf]
          %v1080 = vld [vmem:[%s5 + $0x4] sm:$0xf]
          %v1081 = vld [vmem:[%s5 + $0x8] sm:$0xf]
          %v1082 = vld [vmem:[%s5 + $0xc] sm:$0xf]
          %v1083 = vld [vmem:[%s5 + $0x10] sm:$0xf]
          %v1084 = vld [vmem:[%s5 + $0x14] sm:$0xf]
          %v1085 = vld [vmem:[%s5 + $0x18] sm:$0xf]
          %v1086 = vld [vmem:[%s5 + $0x1c] sm:$0xf]
          %v1087 = vld [vmem:[%s5 + $0x20] sm:$0xf]
          %v1088 = vld [vmem:[%s5 + $0x24] sm:$0xf]
          %v1089 = vld [vmem:[%s5 + $0x28] sm:$0xf]
          %v1090 = vld [vmem:[%s5 + $0x2c] sm:$0xf]
          %v1091 = vld [vmem:[%s5 + $0x30] sm:$0xf]
          %v1092 = vld [vmem:[%s5 + $0x34] sm:$0xf]
          %v1093 = vld [vmem:[%s5 + $0x38] sm:$0xf]
          %v1094 = vld [vmem:[%s5 + $0x3c] sm:$0xf]
          %v1095 = vld [vmem:[%s5 + $0x40] sm:$0xf]
          %v1096 = vld [vmem:[%s5 + $0x44] sm:$0xf]
          %v1097 = vld [vmem:[%s5 + $0x48] sm:$0xf]
          %v1098 = vld [vmem:[%s5 + $0x4c] sm:$0xf]
          %v1099 = vld [vmem:[%s5 + $0x50] sm:$0xf]
          %v1100 = vld [vmem:[%s5 + $0x54] sm:$0xf]
          %v1101 = vld [vmem:[%s5 + $0x58] sm:$0xf]
          %v1102 = vld [vmem:[%s5 + $0x5c] sm:$0xf]
          %v1103 = vld [vmem:[%s5 + $0x60] sm:$0xf]
          %v1104 = vld [vmem:[%s5 + $0x64] sm:$0xf]
          %v1105 = vld [vmem:[%s5 + $0x68] sm:$0xf]
          %v1106 = vld [vmem:[%s5 + $0x6c] sm:$0xf]
          %v1107 = vld [vmem:[%s5 + $0x70] sm:$0xf]
          %v1108 = vld [vmem:[%s5 + $0x74] sm:$0xf]
          %v1109 = vld [vmem:[%s5 + $0x78] sm:$0xf]
          %v1110 = vld [vmem:[%s5 + $0x7c] sm:$0xf]
          %v1111 = vld [vmem:[#allocation7] sm:$0x1]
          %v1113 = vperm.slane %v1111, 0
          %v1147 = vunpack.c.l.b16 %v1079
          %v1148 = vunpack.c.l.b16 %v1080
          %v1149 = vunpack.c.l.b16 %v1081
          %v1150 = vunpack.c.l.b16 %v1082
          %v1151 = vunpack.c.l.b16 %v1083
          %v1152 = vunpack.c.l.b16 %v1084
          %v1153 = vunpack.c.l.b16 %v1085
          %v1154 = vunpack.c.l.b16 %v1086
          %v1155 = vunpack.c.l.b16 %v1087
          %v1156 = vunpack.c.l.b16 %v1088
          %v1157 = vunpack.c.l.b16 %v1089
          %v1158 = vunpack.c.l.b16 %v1090
          %v1159 = vunpack.c.l.b16 %v1091
          %v1160 = vunpack.c.l.b16 %v1092
          %v1161 = vunpack.c.l.b16 %v1093
          %v1162 = vunpack.c.l.b16 %v1094
          %v1163 = vunpack.c.l.b16 %v1095
          %v1164 = vunpack.c.l.b16 %v1096
          %v1165 = vunpack.c.l.b16 %v1097
          %v1166 = vunpack.c.l.b16 %v1098
          %v1167 = vunpack.c.l.b16 %v1099
          %v1168 = vunpack.c.l.b16 %v1100
          %v1169 = vunpack.c.l.b16 %v1101
          %v1170 = vunpack.c.l.b16 %v1102
          %v1171 = vunpack.c.l.b16 %v1103
          %v1172 = vunpack.c.l.b16 %v1104
          %v1173 = vunpack.c.l.b16 %v1105
          %v1174 = vunpack.c.l.b16 %v1106
          %v1175 = vunpack.c.l.b16 %v1107
          %v1176 = vunpack.c.l.b16 %v1108
          %v1177 = vunpack.c.l.b16 %v1109
          %v1178 = vunpack.c.l.b16 %v1110
          %v1179 = vpack.c.b16 %v1148, %v1147
          %v1180 = vpack.c.b16 %v1150, %v1149
          %v1181 = vpack.c.b16 %v1152, %v1151
          %v1182 = vpack.c.b16 %v1154, %v1153
          %v1183 = vpack.c.b16 %v1156, %v1155
          %v1184 = vpack.c.b16 %v1158, %v1157
          %v1185 = vpack.c.b16 %v1160, %v1159
          %v1186 = vpack.c.b16 %v1162, %v1161
          %v1187 = vpack.c.b16 %v1164, %v1163
          %v1188 = vpack.c.b16 %v1166, %v1165
          %v1189 = vpack.c.b16 %v1168, %v1167
          %v1190 = vpack.c.b16 %v1170, %v1169
          %v1191 = vpack.c.b16 %v1172, %v1171
          %v1192 = vpack.c.b16 %v1174, %v1173
          %v1193 = vpack.c.b16 %v1176, %v1175
          %v1194 = vpack.c.b16 %v1178, %v1177
          %1211 = vmatpush.bf16.msra.mxu0 %v1186
          %1212 = vmatpush.bf16.msra.mxu0 %v1185
          %1213 = vmatpush.bf16.msra.mxu0 %v1184
          %1214 = vmatpush.bf16.msra.mxu0 %v1183
          %1215 = vmatpush.bf16.msra.mxu0 %v1182
          %1216 = vmatpush.bf16.msra.mxu0 %v1181
          %1217 = vmatpush.bf16.msra.mxu0 %v1180
          %1218 = vmatpush.bf16.msra.mxu0 %v1179
          %1219 = vmatmul.bf16.gmra.mxu0 %v1077
          %v1220 = vpop.f32.mrf.mxu0
          %v1221 = vadd.f32 %v1113, %v1220
          %v1222 = vpop.f32.mrf.mxu0
          %1223 = vdwg.mxu0
          %1224 = vmatpush.bf16.msra.mxu0 %v1194
          %1225 = vmatpush.bf16.msra.mxu0 %v1193
          %1226 = vmatpush.bf16.msra.mxu0 %v1192
          %1227 = vmatpush.bf16.msra.mxu0 %v1191
          %1228 = vmatpush.bf16.msra.mxu0 %v1190
          %1229 = vmatpush.bf16.msra.mxu0 %v1189
          %1230 = vmatpush.bf16.msra.mxu0 %v1188
          %1231 = vmatpush.bf16.msra.mxu0 %v1187
          %1232 = vmatmul.bf16.gmra.mxu0 %v1078
          %v1233 = vpop.f32.mrf.mxu0
          %v1234 = vadd.f32 %v1221, %v1233
          %v1235 = vpop.f32.mrf.mxu0
          %1236 = vdwg.mxu0
          %v1237 = vmax.f32 %v1234, 0.0
          %v1238 = vsel %vm403, 1, 0
          %vm1239 = vcmp.eq.s32.totalorder %v1238, 1
          %v1240 = vsel %vm1239, %v1237, 0.0
          %v1241 = vld [vmem:[#allocation4] sm:$0x1]
          %v1242 = vrot.slane %v1240, 4
          %v1243 = vadd.f32 %v1240, %v1242
          %v1244 = vrot.slane %v1243, 2
          %v1245 = vadd.f32 %v1243, %v1244
          %v1246 = vrot.slane %v1245, 1
          %v1247 = vadd.f32 %v1245, %v1246
          %v1248 = vadd.f32 %v1241, %v1247
          %1249 = vst [vmem:[#allocation4] sm:$0x1] %v1248
          %v1250 = vld [vmem:[#allocation5] sm:$0x1]
          %v1251 = vmul.f32 %v1240, %v1240
          %v1252 = vrot.slane %v1251, 4
          %v1253 = vadd.f32 %v1251, %v1252
          %v1254 = vrot.slane %v1253, 2
          %v1255 = vadd.f32 %v1253, %v1254
          %v1256 = vrot.slane %v1255, 1
          %v1257 = vadd.f32 %v1255, %v1256
          %v1258 = vadd.f32 %v1250, %v1257
          %1259 = vst [vmem:[#allocation5] sm:$0x1] %v1258
        $region76: #{pre_a_loss2_forward_padded.1} parent=63 // pred_fallthru
          _
        %p1260 = scmp.eq.s32.totalorder %s29, 2
        // Predicated region
        $region81: #{pre_a_loss2_forward_padded.1} parent=63 // pred_check
          %p1261 = pneg %p1260
        $region82: #{pre_a_loss2_forward_padded.1} parent=63 // pred_check_branch
          %1263 = sbr.rel (%p1261) target = $region84
        $region83: #{pre_a_loss2_forward_padded.1} parent=63 // pred_region
          %p1264 = scmp.eq.s32.totalorder %s30, 0
          // Predicated region
          $region85: #{pre_a_loss2_forward_padded.1} parent=83 // pred_check
            %p1265 = pneg %p1264
          $region86: #{pre_a_loss2_forward_padded.1} parent=83 // pred_check_branch
            %1267 = sbr.rel (%p1265) target = $region88
          $region87: #{pre_a_loss2_forward_padded.1} parent=83 // pred_region
            %v1268 = vld [vmem:[#allocation4] sm:$0x1]
            %v1269 = vmul.f32 %v1268, 0.0625
            %v1270 = vld [vmem:[#allocation5] sm:$0x1]
            %v1271 = vmul.f32 %v1270, 0.0625
            %v1272 = vmul.f32 %v1269, %v1269
            %v1273 = vsub.f32 %v1271, %v1272
            %v1274 = vmax.f32 %v1273, 0.0
            %v1275 = vld [vmem:[%s7] sm:$0x1]
            %v1276 = vadd.f32 %v1274, 1e-05
            %v1277 = vrsqrt.pop %v1276
            %v1278 = vmul.f32 %v1277, %v1276
            %v1279 = vmul.f32 %v1278, %v1277
            %v1280 = vmul.f32 0.5, %v1279
            %v1281 = vsub.f32 1.5, %v1280
            %v1282 = vmul.f32 %v1277, %v1281
            %vm1283 = vweird.f32 %v1276
            %vm1284 = vweird.f32 %v1277
            %vm1285 = vmor %vm1283, %vm1284
            %v1286 = vsel %vm1285, %v1277, %v1282
            %v1287 = vmul.f32 %v1275, %v1286
            %v1288 = vld [vmem:[%s8] sm:$0x1]
            %v1289 = vmul.f32 %v1269, %v1287
            %v1290 = vsub.f32 %v1288, %v1289
            %1291 = vst [vmem:[#allocation8] sm:$0x1] %v1287
            %v1292 = vld [vmem:[%s10] sm:$0x1]
            %v1293 = vld [vmem:[%s9] sm:$0xf]
            %v1294 = vld [vmem:[%s9 + $0x4] sm:$0xf]
            %v1295 = vld [vmem:[%s9 + $0x8] sm:$0xf]
            %v1296 = vld [vmem:[%s9 + $0xc] sm:$0xf]
            %v1297 = vld [vmem:[%s9 + $0x10] sm:$0xf]
            %v1298 = vld [vmem:[%s9 + $0x14] sm:$0xf]
            %v1299 = vld [vmem:[%s9 + $0x18] sm:$0xf]
            %v1300 = vld [vmem:[%s9 + $0x1c] sm:$0xf]
            %v1301 = vld [vmem:[%s9 + $0x20] sm:$0xf]
            %v1302 = vld [vmem:[%s9 + $0x24] sm:$0xf]
            %v1303 = vld [vmem:[%s9 + $0x28] sm:$0xf]
            %v1304 = vld [vmem:[%s9 + $0x2c] sm:$0xf]
            %v1305 = vld [vmem:[%s9 + $0x30] sm:$0xf]
            %v1306 = vld [vmem:[%s9 + $0x34] sm:$0xf]
            %v1307 = vld [vmem:[%s9 + $0x38] sm:$0xf]
            %v1308 = vld [vmem:[%s9 + $0x3c] sm:$0xf]
            %v1309 = vunpack.c.l.bf16 %v1293
            %v1310 = vunpack.c.l.bf16 %v1294
            %v1311 = vunpack.c.l.bf16 %v1295
            %v1312 = vunpack.c.l.bf16 %v1296
            %v1313 = vunpack.c.l.bf16 %v1297
            %v1314 = vunpack.c.l.bf16 %v1298
            %v1315 = vunpack.c.l.bf16 %v1299
            %v1316 = vunpack.c.l.bf16 %v1300
            %v1317 = vunpack.c.l.bf16 %v1301
            %v1318 = vunpack.c.l.bf16 %v1302
            %v1319 = vunpack.c.l.bf16 %v1303
            %v1320 = vunpack.c.l.bf16 %v1304
            %v1321 = vunpack.c.l.bf16 %v1305
            %v1322 = vunpack.c.l.bf16 %v1306
            %v1323 = vunpack.c.l.bf16 %v1307
            %v1324 = vunpack.c.l.bf16 %v1308
            %1325 = vmatpush.msra.mxu0 %v1324
            %1326 = vmatpush.msra.mxu0 %v1323
            %1327 = vmatpush.msra.mxu0 %v1322
            %1328 = vmatpush.msra.mxu0 %v1321
            %1329 = vmatpush.msra.mxu0 %v1320
            %1330 = vmatpush.msra.mxu0 %v1319
            %1331 = vmatpush.msra.mxu0 %v1318
            %1332 = vmatpush.msra.mxu0 %v1317
            %1333 = vmatpush.msra.mxu0 %v1316
            %1334 = vmatpush.msra.mxu0 %v1315
            %1335 = vmatpush.msra.mxu0 %v1314
            %1336 = vmatpush.msra.mxu0 %v1313
            %1337 = vmatpush.msra.mxu0 %v1312
            %1338 = vmatpush.msra.mxu0 %v1311
            %1339 = vmatpush.msra.mxu0 %v1310
            %1340 = vmatpush.msra.mxu0 %v1309
            %1341 = vmatmul.f32.gmra.mxu0 %v1290
            %v1342 = vpop.f32.mrf.mxu0
            %v1343 = vadd.f32 0.0, %v1342
            %1344 = vdwg.mxu0
            %v1345 = vadd.f32 %v1292, %v1343
            %1346 = vst [vmem:[#allocation9] sm:$0x1] %v1345
          $region88: #{pre_a_loss2_forward_padded.1} parent=83 // pred_fallthru
            _
          %v1347 = vld [vmem:[%s396] sm:$0xff]
          %v1348 = vld [vmem:[%s396 + $0x8] sm:$0xff]
          %v1349 = vpack.c.bf16 %v1347, %v1347
          %v1350 = vpack.c.bf16 %v1348, %v1348
          %v1351 = vld [vmem:[%s1] sm:$0xff]
          %v1352 = vld [vmem:[%s1 + $0x8] sm:$0xff]
          %v1353 = vld [vmem:[%s1 + $0x10] sm:$0xff]
          %v1354 = vld [vmem:[%s1 + $0x18] sm:$0xff]
          %v1355 = vld [vmem:[%s1 + $0x20] sm:$0xff]
          %v1356 = vld [vmem:[%s1 + $0x28] sm:$0xff]
          %v1357 = vld [vmem:[%s1 + $0x30] sm:$0xff]
          %v1358 = vld [vmem:[%s1 + $0x38] sm:$0xff]
          %v1359 = vld [vmem:[%s1 + $0x40] sm:$0xff]
          %v1360 = vld [vmem:[%s1 + $0x48] sm:$0xff]
          %v1361 = vld [vmem:[%s1 + $0x50] sm:$0xff]
          %v1362 = vld [vmem:[%s1 + $0x58] sm:$0xff]
          %v1363 = vld [vmem:[%s1 + $0x60] sm:$0xff]
          %v1364 = vld [vmem:[%s1 + $0x68] sm:$0xff]
          %v1365 = vld [vmem:[%s1 + $0x70] sm:$0xff]
          %v1366 = vld [vmem:[%s1 + $0x78] sm:$0xff]
          %v1367 = vld [vmem:[%s1 + $0x80] sm:$0xff]
          %v1368 = vld [vmem:[%s1 + $0x88] sm:$0xff]
          %v1369 = vld [vmem:[%s1 + $0x90] sm:$0xff]
          %v1370 = vld [vmem:[%s1 + $0x98] sm:$0xff]
          %v1371 = vld [vmem:[%s1 + $0xa0] sm:$0xff]
          %v1372 = vld [vmem:[%s1 + $0xa8] sm:$0xff]
          %v1373 = vld [vmem:[%s1 + $0xb0] sm:$0xff]
          %v1374 = vld [vmem:[%s1 + $0xb8] sm:$0xff]
          %v1375 = vld [vmem:[%s1 + $0xc0] sm:$0x33]
          %v1376 = vld [vmem:[%s2] sm:$0x3]
          %v1378 = vperm.slane %v1376, 0
          %v1379 = vperm.slane %v1376, 1
          %v1407 = vunpack.c.l.b16 %v1351
          %v1408 = vunpack.c.h.b16 %v1351
          %v1409 = vunpack.c.l.b16 %v1352
          %v1410 = vunpack.c.h.b16 %v1352
          %v1411 = vunpack.c.l.b16 %v1353
          %v1412 = vunpack.c.h.b16 %v1353
          %v1413 = vunpack.c.l.b16 %v1354
          %v1414 = vunpack.c.h.b16 %v1354
          %v1415 = vunpack.c.l.b16 %v1355
          %v1416 = vunpack.c.h.b16 %v1355
          %v1417 = vunpack.c.l.b16 %v1356
          %v1418 = vunpack.c.h.b16 %v1356
          %v1419 = vunpack.c.l.b16 %v1357
          %v1420 = vunpack.c.h.b16 %v1357
          %v1421 = vunpack.c.l.b16 %v1358
          %v1422 = vunpack.c.h.b16 %v1358
          %v1423 = vunpack.c.l.b16 %v1359
          %v1424 = vunpack.c.h.b16 %v1359
          %v1425 = vunpack.c.l.b16 %v1360
          %v1426 = vunpack.c.h.b16 %v1360
          %v1427 = vunpack.c.l.b16 %v1361
          %v1428 = vunpack.c.h.b16 %v1361
          %v1429 = vunpack.c.l.b16 %v1362
          %v1430 = vunpack.c.h.b16 %v1362
          %v1431 = vunpack.c.l.b16 %v1363
          %v1432 = vunpack.c.h.b16 %v1363
          %v1433 = vunpack.c.l.b16 %v1364
          %v1434 = vunpack.c.h.b16 %v1364
          %v1435 = vunpack.c.l.b16 %v1365
          %v1436 = vunpack.c.h.b16 %v1365
          %v1437 = vunpack.c.l.b16 %v1366
          %v1438 = vunpack.c.h.b16 %v1366
          %v1439 = vunpack.c.l.b16 %v1367
          %v1440 = vunpack.c.h.b16 %v1367
          %v1441 = vunpack.c.l.b16 %v1368
          %v1442 = vunpack.c.h.b16 %v1368
          %v1443 = vunpack.c.l.b16 %v1369
          %v1444 = vunpack.c.h.b16 %v1369
          %v1445 = vunpack.c.l.b16 %v1370
          %v1446 = vunpack.c.h.b16 %v1370
          %v1447 = vunpack.c.l.b16 %v1371
          %v1448 = vunpack.c.h.b16 %v1371
          %v1449 = vunpack.c.l.b16 %v1372
          %v1450 = vunpack.c.h.b16 %v1372
          %v1451 = vunpack.c.l.b16 %v1373
          %v1452 = vunpack.c.h.b16 %v1373
          %v1453 = vunpack.c.l.b16 %v1374
          %v1454 = vunpack.c.h.b16 %v1374
          %v1455 = vunpack.c.l.b16 %v1375
          %v1456 = vunpack.c.h.b16 %v1375
          %v1457 = vpack.c.b16 %v1409, %v1407
          %v1458 = vpack.c.b16 %v1410, %v1408
          %v1459 = vpack.c.b16 %v1413, %v1411
          %v1460 = vpack.c.b16 %v1414, %v1412
          %v1461 = vpack.c.b16 %v1417, %v1415
          %v1462 = vpack.c.b16 %v1418, %v1416
          %v1463 = vpack.c.b16 %v1421, %v1419
          %v1464 = vpack.c.b16 %v1422, %v1420
          %v1465 = vpack.c.b16 %v1425, %v1423
          %v1466 = vpack.c.b16 %v1426, %v1424
          %v1467 = vpack.c.b16 %v1429, %v1427
          %v1468 = vpack.c.b16 %v1430, %v1428
          %v1469 = vpack.c.b16 %v1433, %v1431
          %v1470 = vpack.c.b16 %v1434, %v1432
          %v1471 = vpack.c.b16 %v1437, %v1435
          %v1472 = vpack.c.b16 %v1438, %v1436
          %v1473 = vpack.c.b16 %v1441, %v1439
          %v1474 = vpack.c.b16 %v1442, %v1440
          %v1475 = vpack.c.b16 %v1445, %v1443
          %v1476 = vpack.c.b16 %v1446, %v1444
          %v1477 = vpack.c.b16 %v1449, %v1447
          %v1478 = vpack.c.b16 %v1450, %v1448
          %v1479 = vpack.c.b16 %v1453, %v1451
          %v1480 = vpack.c.b16 %v1454, %v1452
          %v1481 = vpack.c.b16 %v1455, %v1455
          %v1482 = vpack.c.b16 %v1456, %v1456
          %vm1507 = vcmask 556032
          %v1509 = vsel %vm1507, %v1350, 0
          %vm1511 = vcmask 1041408
          %v1513 = vsel %vm1511, %v1481, 0
          %v1516 = vsel %vm1511, %v1482, 0
          %1518 = vmatpush.bf16.msra.mxu0 %v1471
          %1519 = vmatpush.bf16.msra.mxu0 %v1469
          %1520 = vmatpush.bf16.msra.mxu0 %v1467
          %1521 = vmatpush.bf16.msra.mxu0 %v1465
          %1522 = vmatpush.bf16.msra.mxu0 %v1463
          %1523 = vmatpush.bf16.msra.mxu0 %v1461
          %1524 = vmatpush.bf16.msra.mxu0 %v1459
          %1525 = vmatpush.bf16.msra.mxu0 %v1457
          %1526 = vmatmul.bf16.gmra.mxu0 %v1349
          %v1527 = vpop.f32.mrf.mxu0
          %v1528 = vadd.f32 %v1378, %v1527
          %v1529 = vpop.f32.mrf.mxu0
          %1530 = vdwg.mxu0
          %1531 = vmatpush.bf16.msra.mxu0 0
          %1532 = vmatpush.bf16.msra.mxu0 0
          %1533 = vmatpush.bf16.msra.mxu0 0
          %1534 = vmatpush.bf16.msra.mxu0 %v1513
          %1535 = vmatpush.bf16.msra.mxu0 %v1479
          %1536 = vmatpush.bf16.msra.mxu0 %v1477
          %1537 = vmatpush.bf16.msra.mxu0 %v1475
          %1538 = vmatpush.bf16.msra.mxu0 %v1473
          %1539 = vmatmul.bf16.gmra.mxu0 %v1509
          %v1540 = vpop.f32.mrf.mxu0
          %v1541 = vadd.f32 %v1528, %v1540
          %v1542 = vpop.f32.mrf.mxu0
          %1543 = vdwg.mxu0
          %1544 = vmatpush.bf16.msra.mxu0 %v1472
          %1545 = vmatpush.bf16.msra.mxu0 %v1470
          %1546 = vmatpush.bf16.msra.mxu0 %v1468
          %1547 = vmatpush.bf16.msra.mxu0 %v1466
          %1548 = vmatpush.bf16.msra.mxu0 %v1464
          %1549 = vmatpush.bf16.msra.mxu0 %v1462
          %1550 = vmatpush.bf16.msra.mxu0 %v1460
          %1551 = vmatpush.bf16.msra.mxu0 %v1458
          %1552 = vmatmul.bf16.gmra.mxu0 %v1349
          %v1553 = vpop.f32.mrf.mxu0
          %v1554 = vadd.f32 %v1379, %v1553
          %v1555 = vpop.f32.mrf.mxu0
          %1556 = vdwg.mxu0
          %1557 = vmatpush.bf16.msra.mxu0 0
          %1558 = vmatpush.bf16.msra.mxu0 0
          %1559 = vmatpush.bf16.msra.mxu0 0
          %1560 = vmatpush.bf16.msra.mxu0 %v1516
          %1561 = vmatpush.bf16.msra.mxu0 %v1480
          %1562 = vmatpush.bf16.msra.mxu0 %v1478
          %1563 = vmatpush.bf16.msra.mxu0 %v1476
          %1564 = vmatpush.bf16.msra.mxu0 %v1474
          %1565 = vmatmul.bf16.gmra.mxu0 %v1509
          %v1566 = vpop.f32.mrf.mxu0
          %v1567 = vadd.f32 %v1554, %v1566
          %v1568 = vpop.f32.mrf.mxu0
          %1569 = vdwg.mxu0
          %v1570 = vmax.f32 %v1541, 0.0
          %v1571 = vmax.f32 %v1567, 0.0
          %v1572 = vld [vmem:[#allocation6] sm:$0x3]
          %v1574 = vperm.slane %v1572, 0
          %v1575 = vperm.slane %v1572, 1
          %v1578 = vmul.f32 %v1570, %v1574
          %v1579 = vmul.f32 %v1571, %v1575
          %v1580 = vpack.c.bf16 %v1578, %v1578
          %v1581 = vpack.c.bf16 %v1579, %v1579
          %v1582 = vld [vmem:[%s5] sm:$0xf]
          %v1583 = vld [vmem:[%s5 + $0x4] sm:$0xf]
          %v1584 = vld [vmem:[%s5 + $0x8] sm:$0xf]
          %v1585 = vld [vmem:[%s5 + $0xc] sm:$0xf]
          %v1586 = vld [vmem:[%s5 + $0x10] sm:$0xf]
          %v1587 = vld [vmem:[%s5 + $0x14] sm:$0xf]
          %v1588 = vld [vmem:[%s5 + $0x18] sm:$0xf]
          %v1589 = vld [vmem:[%s5 + $0x1c] sm:$0xf]
          %v1590 = vld [vmem:[%s5 + $0x20] sm:$0xf]
          %v1591 = vld [vmem:[%s5 + $0x24] sm:$0xf]
          %v1592 = vld [vmem:[%s5 + $0x28] sm:$0xf]
          %v1593 = vld [vmem:[%s5 + $0x2c] sm:$0xf]
          %v1594 = vld [vmem:[%s5 + $0x30] sm:$0xf]
          %v1595 = vld [vmem:[%s5 + $0x34] sm:$0xf]
          %v1596 = vld [vmem:[%s5 + $0x38] sm:$0xf]
          %v1597 = vld [vmem:[%s5 + $0x3c] sm:$0xf]
          %v1598 = vld [vmem:[%s5 + $0x40] sm:$0xf]
          %v1599 = vld [vmem:[%s5 + $0x44] sm:$0xf]
          %v1600 = vld [vmem:[%s5 + $0x48] sm:$0xf]
          %v1601 = vld [vmem:[%s5 + $0x4c] sm:$0xf]
          %v1602 = vld [vmem:[%s5 + $0x50] sm:$0xf]
          %v1603 = vld [vmem:[%s5 + $0x54] sm:$0xf]
          %v1604 = vld [vmem:[%s5 + $0x58] sm:$0xf]
          %v1605 = vld [vmem:[%s5 + $0x5c] sm:$0xf]
          %v1606 = vld [vmem:[%s5 + $0x60] sm:$0xf]
          %v1607 = vld [vmem:[%s5 + $0x64] sm:$0xf]
          %v1608 = vld [vmem:[%s5 + $0x68] sm:$0xf]
          %v1609 = vld [vmem:[%s5 + $0x6c] sm:$0xf]
          %v1610 = vld [vmem:[%s5 + $0x70] sm:$0xf]
          %v1611 = vld [vmem:[%s5 + $0x74] sm:$0xf]
          %v1612 = vld [vmem:[%s5 + $0x78] sm:$0xf]
          %v1613 = vld [vmem:[%s5 + $0x7c] sm:$0xf]
          %v1614 = vld [vmem:[#allocation7] sm:$0x1]
          %v1616 = vperm.slane %v1614, 0
          %v1650 = vunpack.c.l.b16 %v1582
          %v1651 = vunpack.c.l.b16 %v1583
          %v1652 = vunpack.c.l.b16 %v1584
          %v1653 = vunpack.c.l.b16 %v1585
          %v1654 = vunpack.c.l.b16 %v1586
          %v1655 = vunpack.c.l.b16 %v1587
          %v1656 = vunpack.c.l.b16 %v1588
          %v1657 = vunpack.c.l.b16 %v1589
          %v1658 = vunpack.c.l.b16 %v1590
          %v1659 = vunpack.c.l.b16 %v1591
          %v1660 = vunpack.c.l.b16 %v1592
          %v1661 = vunpack.c.l.b16 %v1593
          %v1662 = vunpack.c.l.b16 %v1594
          %v1663 = vunpack.c.l.b16 %v1595
          %v1664 = vunpack.c.l.b16 %v1596
          %v1665 = vunpack.c.l.b16 %v1597
          %v1666 = vunpack.c.l.b16 %v1598
          %v1667 = vunpack.c.l.b16 %v1599
          %v1668 = vunpack.c.l.b16 %v1600
          %v1669 = vunpack.c.l.b16 %v1601
          %v1670 = vunpack.c.l.b16 %v1602
          %v1671 = vunpack.c.l.b16 %v1603
          %v1672 = vunpack.c.l.b16 %v1604
          %v1673 = vunpack.c.l.b16 %v1605
          %v1674 = vunpack.c.l.b16 %v1606
          %v1675 = vunpack.c.l.b16 %v1607
          %v1676 = vunpack.c.l.b16 %v1608
          %v1677 = vunpack.c.l.b16 %v1609
          %v1678 = vunpack.c.l.b16 %v1610
          %v1679 = vunpack.c.l.b16 %v1611
          %v1680 = vunpack.c.l.b16 %v1612
          %v1681 = vunpack.c.l.b16 %v1613
          %v1682 = vpack.c.b16 %v1651, %v1650
          %v1683 = vpack.c.b16 %v1653, %v1652
          %v1684 = vpack.c.b16 %v1655, %v1654
          %v1685 = vpack.c.b16 %v1657, %v1656
          %v1686 = vpack.c.b16 %v1659, %v1658
          %v1687 = vpack.c.b16 %v1661, %v1660
          %v1688 = vpack.c.b16 %v1663, %v1662
          %v1689 = vpack.c.b16 %v1665, %v1664
          %v1690 = vpack.c.b16 %v1667, %v1666
          %v1691 = vpack.c.b16 %v1669, %v1668
          %v1692 = vpack.c.b16 %v1671, %v1670
          %v1693 = vpack.c.b16 %v1673, %v1672
          %v1694 = vpack.c.b16 %v1675, %v1674
          %v1695 = vpack.c.b16 %v1677, %v1676
          %v1696 = vpack.c.b16 %v1679, %v1678
          %v1697 = vpack.c.b16 %v1681, %v1680
          %1714 = vmatpush.bf16.msra.mxu0 %v1689
          %1715 = vmatpush.bf16.msra.mxu0 %v1688
          %1716 = vmatpush.bf16.msra.mxu0 %v1687
          %1717 = vmatpush.bf16.msra.mxu0 %v1686
          %1718 = vmatpush.bf16.msra.mxu0 %v1685
          %1719 = vmatpush.bf16.msra.mxu0 %v1684
          %1720 = vmatpush.bf16.msra.mxu0 %v1683
          %1721 = vmatpush.bf16.msra.mxu0 %v1682
          %1722 = vmatmul.bf16.gmra.mxu0 %v1580
          %v1723 = vpop.f32.mrf.mxu0
          %v1724 = vadd.f32 %v1616, %v1723
          %v1725 = vpop.f32.mrf.mxu0
          %1726 = vdwg.mxu0
          %1727 = vmatpush.bf16.msra.mxu0 %v1697
          %1728 = vmatpush.bf16.msra.mxu0 %v1696
          %1729 = vmatpush.bf16.msra.mxu0 %v1695
          %1730 = vmatpush.bf16.msra.mxu0 %v1694
          %1731 = vmatpush.bf16.msra.mxu0 %v1693
          %1732 = vmatpush.bf16.msra.mxu0 %v1692
          %1733 = vmatpush.bf16.msra.mxu0 %v1691
          %1734 = vmatpush.bf16.msra.mxu0 %v1690
          %1735 = vmatmul.bf16.gmra.mxu0 %v1581
          %v1736 = vpop.f32.mrf.mxu0
          %v1737 = vadd.f32 %v1724, %v1736
          %v1738 = vpop.f32.mrf.mxu0
          %1739 = vdwg.mxu0
          %v1740 = vmax.f32 %v1737, 0.0
          %v1741 = vld [vmem:[#allocation8] sm:$0x1]
          %v1743 = vperm.slane %v1741, 0
          %v1745 = vmul.f32 %v1740, %v1743
          %v1746 = vpack.c.bf16 %v1745, %v1745
          %v1747 = vld [vmem:[%s9] sm:$0xf]
          %v1748 = vld [vmem:[%s9 + $0x4] sm:$0xf]
          %v1749 = vld [vmem:[%s9 + $0x8] sm:$0xf]
          %v1750 = vld [vmem:[%s9 + $0xc] sm:$0xf]
          %v1751 = vld [vmem:[%s9 + $0x10] sm:$0xf]
          %v1752 = vld [vmem:[%s9 + $0x14] sm:$0xf]
          %v1753 = vld [vmem:[%s9 + $0x18] sm:$0xf]
          %v1754 = vld [vmem:[%s9 + $0x1c] sm:$0xf]
          %v1755 = vld [vmem:[%s9 + $0x20] sm:$0xf]
          %v1756 = vld [vmem:[%s9 + $0x24] sm:$0xf]
          %v1757 = vld [vmem:[%s9 + $0x28] sm:$0xf]
          %v1758 = vld [vmem:[%s9 + $0x2c] sm:$0xf]
          %v1759 = vld [vmem:[%s9 + $0x30] sm:$0xf]
          %v1760 = vld [vmem:[%s9 + $0x34] sm:$0xf]
          %v1761 = vld [vmem:[%s9 + $0x38] sm:$0xf]
          %v1762 = vld [vmem:[%s9 + $0x3c] sm:$0xf]
          %v1763 = vld [vmem:[#allocation9] sm:$0x1]
          %v1765 = vperm.slane %v1763, 0
          %v1783 = vunpack.c.l.b16 %v1747
          %v1784 = vunpack.c.l.b16 %v1748
          %v1785 = vunpack.c.l.b16 %v1749
          %v1786 = vunpack.c.l.b16 %v1750
          %v1787 = vunpack.c.l.b16 %v1751
          %v1788 = vunpack.c.l.b16 %v1752
          %v1789 = vunpack.c.l.b16 %v1753
          %v1790 = vunpack.c.l.b16 %v1754
          %v1791 = vunpack.c.l.b16 %v1755
          %v1792 = vunpack.c.l.b16 %v1756
          %v1793 = vunpack.c.l.b16 %v1757
          %v1794 = vunpack.c.l.b16 %v1758
          %v1795 = vunpack.c.l.b16 %v1759
          %v1796 = vunpack.c.l.b16 %v1760
          %v1797 = vunpack.c.l.b16 %v1761
          %v1798 = vunpack.c.l.b16 %v1762
          %v1799 = vpack.c.b16 %v1784, %v1783
          %v1800 = vpack.c.b16 %v1786, %v1785
          %v1801 = vpack.c.b16 %v1788, %v1787
          %v1802 = vpack.c.b16 %v1790, %v1789
          %v1803 = vpack.c.b16 %v1792, %v1791
          %v1804 = vpack.c.b16 %v1794, %v1793
          %v1805 = vpack.c.b16 %v1796, %v1795
          %v1806 = vpack.c.b16 %v1798, %v1797
          %1815 = vmatpush.bf16.msra.mxu0 %v1806
          %1816 = vmatpush.bf16.msra.mxu0 %v1805
          %1817 = vmatpush.bf16.msra.mxu0 %v1804
          %1818 = vmatpush.bf16.msra.mxu0 %v1803
          %1819 = vmatpush.bf16.msra.mxu0 %v1802
          %1820 = vmatpush.bf16.msra.mxu0 %v1801
          %1821 = vmatpush.bf16.msra.mxu0 %v1800
          %1822 = vmatpush.bf16.msra.mxu0 %v1799
          %1823 = vmatmul.bf16.gmra.mxu0 %v1746
          %v1824 = vpop.f32.mrf.mxu0
          %v1825 = vadd.f32 %v1765, %v1824
          %v1826 = vpop.f32.mrf.mxu0
          %1827 = vdwg.mxu0
          %1828 = vmax.xlane.f32.xlu0 %v1825
          %v1829 = vpop.xlane.xlu0 %1828
          %v1830 = vsub.f32 %v1825, %v1829
          %v1831 = vmul.f32 %v1830, 1.442695
          %v1832 = vpow.pop %v1831
          %1833 = vadd.xlane.f32.xlu0 %v1832
          %v1834 = vpop.xlane.xlu0 %1833
          %v1835 = vrcp.pop %v1834
          %v1836 = vmul.f32 %v1834, %v1835
          %v1837 = vsub.f32 1.0, %v1836
          %v1838 = vmul.f32 %v1835, %v1837
          %v1839 = vadd.f32 %v1835, %v1838
          %vm1840 = vweird.f32 %v1834
          %vm1841 = vweird.f32 %v1835
          %vm1842 = vmor %vm1840, %vm1841
          %v1843 = vsel %vm1842, %v1835, %v1839
          %v1844 = vand.u32 2147483647, %v1834
          %vm1845 = vcmp.eq.f32.partialorder %v1844, 8.507059e+37
          %v1846 = vand.u32 %v1834, 2147483648
          %v1847 = vor.u32 1.1754944e-38, %v1846
          %v1848 = vsel %vm1845, %v1847, %v1843
          %v1849 = vmul.f32 %v1832, %v1848
          %1850 = vst [vmem:[%s391] sm:$0xff] %v1849
        $region84: #{pre_a_loss2_forward_padded.1} parent=63 // pred_fallthru
          _
        %s1851 = sand.u32 %s281, 1
        %s1852 = scalar_lea.sflag [#allocation11], %s1851
        %s1853 = sand.u32 %s281, 1
        %s1854 = smul.addr %s1853, 8
        %s1855 = scalar_lea.vmem [#allocation10], %s1854
        // Predicated region
        $region89: #{pre_a_loss2_forward_padded.1} parent=63 // pred_check
          %p1856 = pneg %p291
        $region90: #{pre_a_loss2_forward_padded.1} parent=63 // pred_check_branch
          %1858 = sbr.rel (%p1856) target = $region92
        $region91: #{pre_a_loss2_forward_padded.1} parent=63 // pred_region
          %1860 = vsyncadd %s1852, 0
          %s1861 = smul.addr %s30, 8
          %s1862 = scalar_lea.hbm %s11, %s1861
          %s1864 = sshll.u32 %s1855, 4
          %s1865 = int_to_ptr.vmem [resolvable:$true] %s1864
          %s1866 = sshll.u32 %s1862, 4
          %s1867 = int_to_ptr.hbm [resolvable:$true] %s1866
          %1869 = dma.vmem_to_hbm [thread:$0]  %s1865, 128, %s1867, %s1852
        $region92: #{pre_a_loss2_forward_padded.1} parent=63 // pred_fallthru
          _
      $region64: #{pre_a_loss2_forward_padded.1} parent=5 // pred_fallthru
        _
      %p1870 = scmp.le.s32.totalorder 2, %s20
      // Predicated region
      $region93: #{pre_a_loss2_forward_padded.1} parent=5 // pred_check
        %p1871 = pneg %p1870
      $region94: #{pre_a_loss2_forward_padded.1} parent=5 // pred_check_branch
        %1873 = sbr.rel (%p1871) target = $region96
      $region95: #{pre_a_loss2_forward_padded.1} parent=5 // pred_region
        %s1874 = ssub.s32 %s20, 2
        // Predicated region
        $region97: #{pre_a_loss2_forward_padded.1} parent=95 // pred_check
          %p1875 = pneg %p297
        $region98: #{pre_a_loss2_forward_padded.1} parent=95 // pred_check_branch
          %1877 = sbr.rel (%p1875) target = $region100
        $region99: #{pre_a_loss2_forward_padded.1} parent=95 // pred_region
          %s1878 = sand.u32 %s282, 1
          %s1879 = scalar_lea.sflag [#allocation11], %s1878
          %s1880 = sand.u32 %s282, 1
          %s1881 = smul.addr %s1880, 8
          %s1882 = scalar_lea.vmem [#allocation10], %s1881
          %1884 = dma.done %s1879, 128
        $region100: #{pre_a_loss2_forward_padded.1} parent=95 // pred_fallthru
          _
      $region96: #{pre_a_loss2_forward_padded.1} parent=5 // pred_fallthru
        _
    $region6: #{pre_a_loss2_forward_padded.1} parent=1 // loop_footer
      %s24 = sadd.s32 1, %s20
    $region7: #{pre_a_loss2_forward_padded.1} parent=1 // loop_footer_branch
      %19 = sbr.rel target = $region3
    $region8: #{pre_a_loss2_forward_padded.1} parent=1 // loop_exit
      _
    %1885 = vsyncpa [#allocation11], 1
    %s1886 = scalar_lea.sflag [#allocation11], 1
    %1887 = vsyncpa %s1886, 1

</llo_original>
